<compile_context>
chip_gen: v7x
topology: tpu7x:2x2x1
jax: 0.10.0
libtpu: 0.0.40
codegen_flags: <defaults>
</compile_context>

<pallas_src>
import jax
import jax.numpy as jnp
from jax.experimental import pallas as pl
from jax.experimental.pallas import tpu as pltpu

FILTER_LENGTH = 128
HOP_LENGTH = 64
CUTOFF = FILTER_LENGTH // 2 + 1            # 65 spectral bins
FEAT_PAD = 128                             # spectral bins zero-padded to 128 lanes
HIDDEN = 128
BN_EPS = 1e-5

# Encoder config: (in_channels, out_channels, kernel_size, stride)
ENCODER_CFG = [(65, 128, 3, 1), (128, 64, 3, 2), (64, 64, 3, 2), (64, 128, 3, 1)]
# padded input-channel count actually seen by each layer's im2col weight
ENCODER_CIN_PAD = [FEAT_PAD, 128, 64, 64]


def _silero_kernel(
    frames_ref, state_ref, basis_ref,
    w0, b0, g0, be0,
    w1, b1, g1, be1,
    w2, b2, g2, be2,
    w3, b3, g3, be3,
    wlstm_ref, blstm_ref, wdec_ref, bdec_ref,
    out_ref, state_out_ref,
    h_scr, c_scr,
):
    chunk = pl.program_id(0)

    # Load the incoming recurrent state into the VMEM carry on the first chunk.
    @pl.when(chunk == 0)
    def _():
        h_scr[...] = state_ref[0]
        c_scr[...] = state_ref[1]

    B = state_ref.shape[1]
    frames = frames_ref[0]                                    # (n_frames*B, 128), time-major
    n_frames = frames.shape[0] // B

    # ---- STFT: one GEMM against the fused [real | imag] basis, then magnitude.
    spec = jnp.dot(frames, basis_ref[...], preferred_element_type=jnp.float32)  # (nf*B, 256)
    real = spec[:, :FEAT_PAD]
    imag = spec[:, FEAT_PAD:]
    feats = jnp.sqrt(real * real + imag * imag)               # (nf*B, 128); lanes >=65 are 0
    # phase = atan2(imag, real) is computed but never used in the torch model.

    # ---- Encoder: 4 x [Conv1d(k=3, pad=1) -> BatchNorm1d(train) -> ReLU],
    # each lowered to a single im2col GEMM over the (time*batch, channel) slab.
    def conv_bn_relu(h, l_in, w_ref, b_ref, g_ref, be_ref, stride):
        l_out = (l_in + 2 - 3) // stride + 1
        zero = jnp.zeros((B, h.shape[1]), jnp.float32)
        hp = jnp.concatenate([zero, h, zero], axis=0)         # time padding=1 (time-major rows)
        cols = []
        for k in range(3):
            if stride == 1:
                cols.append(hp[k * B:(k + l_out) * B])
            else:
                blocks = [hp[(t * stride + k) * B:(t * stride + k + 1) * B]
                          for t in range(l_out)]
                cols.append(blocks[0] if l_out == 1 else jnp.concatenate(blocks, axis=0))
        patches = jnp.concatenate(cols, axis=1)               # (l_out*B, 3*Cin)
        y = jnp.dot(patches, w_ref[...], preferred_element_type=jnp.float32) + b_ref[...]
        # BatchNorm1d in *training* mode (only decoder.eval() is called in torch):
        # biased batch stats over all (batch, time) positions per channel.
        n = float(y.shape[0])
        mean = jnp.sum(y, axis=0, keepdims=True) / n
        var = jnp.maximum(jnp.sum(y * y, axis=0, keepdims=True) / n - mean * mean, 0.0)
        y = (y - mean) * (g_ref[...] * jax.lax.rsqrt(var + BN_EPS)) + be_ref[...]
        return jnp.maximum(y, 0.0), l_out

    h, l = conv_bn_relu(feats, n_frames, w0, b0, g0, be0, ENCODER_CFG[0][3])
    h, l = conv_bn_relu(h, l, w1, b1, g1, be1, ENCODER_CFG[1][3])
    h, l = conv_bn_relu(h, l, w2, b2, g2, be2, ENCODER_CFG[2][3])
    h, l = conv_bn_relu(h, l, w3, b3, g3, be3, ENCODER_CFG[3][3])
    xvec = h                                                  # l == 1  ->  (B, 128)

    # ---- Decoder: LSTMCell(128,128) as one fused gate GEMM (torch gate order i,f,g,o).
    h_prev = h_scr[...]
    c_prev = c_scr[...]
    lhs = jnp.concatenate([xvec, h_prev], axis=1)             # (B, 256)
    gates = (jnp.dot(lhs, wlstm_ref[...], preferred_element_type=jnp.float32)
             + blstm_ref[...])                                # (B, 512)
    i_g = jax.nn.sigmoid(gates[:, 0 * HIDDEN:1 * HIDDEN])
    f_g = jax.nn.sigmoid(gates[:, 1 * HIDDEN:2 * HIDDEN])
    g_g = jnp.tanh(gates[:, 2 * HIDDEN:3 * HIDDEN])
    o_g = jax.nn.sigmoid(gates[:, 3 * HIDDEN:4 * HIDDEN])
    c_new = f_g * c_prev + i_g * g_g
    h_new = o_g * jnp.tanh(c_new)
    h_scr[...] = h_new
    c_scr[...] = c_new

    # Dropout(0.1) is in eval mode -> identity; then ReLU -> Conv1d(128,1,1) -> Sigmoid.
    hr = jnp.maximum(h_new, 0.0)
    logit = jnp.dot(hr, wdec_ref[...], preferred_element_type=jnp.float32) + bdec_ref[...]
    out_ref[0] = jax.nn.sigmoid(logit)                        # (B, 1)

    # Emit the recurrent state once, after the last chunk.
    @pl.when(chunk == pl.num_programs(0) - 1)
    def _():
        state_out_ref[0] = h_new
        state_out_ref[1] = c_new


def _const_spec(shape):
    nd = len(shape)
    return pl.BlockSpec(shape, lambda c, nd=nd: (0,) * nd)


@jax.jit
def silero_vad_forward(audio, state, params):
    """audio: (num_chunks, B, T) float32; state: (2, B, 128) float32 (h, c).

    Processes all chunks in a single pallas_call (streaming recurrence carried
    in VMEM).  Returns (out (num_chunks, B, 1, 1), new_state (2, B, 128)).
    """
    nc, B, T = audio.shape
    n_frames = (T + HOP_LENGTH - FILTER_LENGTH) // HOP_LENGTH + 1
    # sanity: the encoder must collapse the time axis to 1 (as the torch model assumes)
    l = n_frames
    for (_, _, _, s) in ENCODER_CFG:
        l = (l + 2 - 3) // s + 1
    assert l == 1, f"encoder output length {l} != 1; pick T so it collapses to 1"

    # Reflect pad + pre-frame ALL chunks in one shot (amortized over the whole
    # call); every in-kernel STFT load is then 128-lane aligned.
    xp = jnp.pad(audio.astype(jnp.float32), ((0, 0), (0, 0), (0, HOP_LENGTH)),
                 mode="reflect")
    frames = jnp.stack(
        [xp[:, :, t * HOP_LENGTH:t * HOP_LENGTH + FILTER_LENGTH]
         for t in range(n_frames)], axis=1)                   # (nc, n_frames, B, 128)
    frames = frames.reshape(nc, n_frames * B, FILTER_LENGTH)  # time-major rows t*B + b

    inputs = [frames, state.astype(jnp.float32)] + list(params)
    out_shapes = (jax.ShapeDtypeStruct((nc, B, 1), jnp.float32),
                  jax.ShapeDtypeStruct((2, B, HIDDEN), jnp.float32))
    in_specs = ([pl.BlockSpec((1, n_frames * B, FILTER_LENGTH), lambda c: (c, 0, 0))]
                + [_const_spec(a.shape) for a in inputs[1:]])
    out_specs = (pl.BlockSpec((1, B, 1), lambda c: (c, 0, 0)),
                 _const_spec((2, B, HIDDEN)))

    out, new_state = pl.pallas_call(
        _silero_kernel,
        grid=(nc,),
        in_specs=in_specs,
        out_specs=out_specs,
        out_shape=out_shapes,
        scratch_shapes=[pltpu.VMEM((B, HIDDEN), jnp.float32),   # h carry
                        pltpu.VMEM((B, HIDDEN), jnp.float32)],  # c carry
        compiler_params=pltpu.CompilerParams(
            dimension_semantics=("arbitrary",)),                # recurrence over chunks
    )(*inputs)
    return out.reshape(nc, B, 1, 1), new_state


def init_params(key):
    """Deterministic synthetic parameters, pre-reshaped into GEMM-friendly form.

    # TODO(synk): the real model loads forward_basis_buffer.pt / conv state
    # dicts from disk; here we build the equivalent deterministic DFT basis and
    # random conv/LSTM weights in the fused layouts the kernel expects.
    """
    params = []

    # Fused STFT basis: (128, 256) = [cos | zero-pad | -sin | zero-pad]
    n = jnp.arange(FILTER_LENGTH, dtype=jnp.float32)
    k = jnp.arange(CUTOFF, dtype=jnp.float32)[:, None]
    ang = 2.0 * jnp.pi * k * n[None, :] / FILTER_LENGTH
    basis = jnp.zeros((FILTER_LENGTH, 2 * FEAT_PAD), jnp.float32)
    basis = basis.at[:, :CUTOFF].set(jnp.cos(ang).T)
    basis = basis.at[:, FEAT_PAD:FEAT_PAD + CUTOFF].set((-jnp.sin(ang)).T)
    params.append(basis)

    keys = iter(jax.random.split(key, 16))
    for li, (cin, cout, ksz, _s) in enumerate(ENCODER_CFG):
        fan_in = float(cin * ksz)
        w = jax.random.normal(next(keys), (ksz, cin, cout), jnp.float32) / jnp.sqrt(fan_in)
        cin_p = ENCODER_CIN_PAD[li]
        if cin_p != cin:  # zero rows for lane-padded input channels (layer 0)
            w = jnp.concatenate(
                [w, jnp.zeros((ksz, cin_p - cin, cout), jnp.float32)], axis=1)
        params.append(w.reshape(ksz * cin_p, cout))            # im2col weight (3*Cin, Cout)
        params.append(jax.random.normal(next(keys), (1, cout), jnp.float32) * 0.01)  # bias
        params.append(jnp.ones((1, cout), jnp.float32))         # BN gamma
        params.append(jnp.zeros((1, cout), jnp.float32))        # BN beta

    s = 1.0 / jnp.sqrt(float(HIDDEN))
    wih = jax.random.normal(next(keys), (HIDDEN, 4 * HIDDEN), jnp.float32) * s  # W_ih^T
    whh = jax.random.normal(next(keys), (HIDDEN, 4 * HIDDEN), jnp.float32) * s  # W_hh^T
    bih = jax.random.normal(next(keys), (1, 4 * HIDDEN), jnp.float32) * s
    bhh = jax.random.normal(next(keys), (1, 4 * HIDDEN), jnp.float32) * s
    params.append(jnp.concatenate([wih, whh], axis=0))          # (256, 512) fused gate weight
    params.append(bih + bhh)                                    # (1, 512) fused gate bias
    params.append(jax.random.normal(next(keys), (HIDDEN, 1), jnp.float32) * s)  # Conv1d(128,1,1)
    params.append(jax.random.normal(next(keys), (1, 1), jnp.float32) * s)
    return params


if __name__ == "__main__":
    key = jax.random.PRNGKey(0)
    kx, kp = jax.random.split(key)

    B, T, NUM_CHUNKS = 2, 256, 8        # T chosen so the encoder collapses time to 1
    audio = jax.random.normal(kx, (NUM_CHUNKS, B, T), jnp.float32) * 0.1
    state = jnp.zeros((2, B, HIDDEN), jnp.float32)
    params = init_params(kp)

    out, state1 = silero_vad_forward(audio, state, params)
    # chain a second multi-chunk call to exercise the recurrent state path
    out2, state2 = silero_vad_forward(audio, state1, params)
    jax.block_until_ready((out, state1, out2, state2))

    assert out.shape == (NUM_CHUNKS, B, 1, 1) and state1.shape == (2, B, HIDDEN)
    assert bool(jnp.all(jnp.isfinite(out))) and bool(jnp.all(jnp.isfinite(state1)))
    print("KERNEL_OK")
</pallas_src>

<mosaic_0001>
module attributes {stable_mosaic.version = 11 : i64} {
  func.func @_silero_kernel(%arg0: i32, %arg1: memref<1x8x128xf32, #tpu.memory_space<vmem>>, %arg2: memref<2x2x128xf32, #tpu.memory_space<vmem>>, %arg3: memref<128x256xf32, #tpu.memory_space<vmem>>, %arg4: memref<384x128xf32, #tpu.memory_space<vmem>>, %arg5: memref<1x128xf32, #tpu.memory_space<vmem>>, %arg6: memref<1x128xf32, #tpu.memory_space<vmem>>, %arg7: memref<1x128xf32, #tpu.memory_space<vmem>>, %arg8: memref<384x64xf32, #tpu.memory_space<vmem>>, %arg9: memref<1x64xf32, #tpu.memory_space<vmem>>, %arg10: memref<1x64xf32, #tpu.memory_space<vmem>>, %arg11: memref<1x64xf32, #tpu.memory_space<vmem>>, %arg12: memref<192x64xf32, #tpu.memory_space<vmem>>, %arg13: memref<1x64xf32, #tpu.memory_space<vmem>>, %arg14: memref<1x64xf32, #tpu.memory_space<vmem>>, %arg15: memref<1x64xf32, #tpu.memory_space<vmem>>, %arg16: memref<192x128xf32, #tpu.memory_space<vmem>>, %arg17: memref<1x128xf32, #tpu.memory_space<vmem>>, %arg18: memref<1x128xf32, #tpu.memory_space<vmem>>, %arg19: memref<1x128xf32, #tpu.memory_space<vmem>>, %arg20: memref<256x512xf32, #tpu.memory_space<vmem>>, %arg21: memref<1x512xf32, #tpu.memory_space<vmem>>, %arg22: memref<128x1xf32, #tpu.memory_space<vmem>>, %arg23: memref<1x1xf32, #tpu.memory_space<vmem>>, %arg24: memref<1x2x1xf32, #tpu.memory_space<vmem>>, %arg25: memref<2x2x128xf32, #tpu.memory_space<vmem>>, %arg26: memref<2x128xf32, #tpu.memory_space<vmem>>, %arg27: memref<2x128xf32, #tpu.memory_space<vmem>>) attributes {dimension_semantics = [#tpu.dimension_semantics<arbitrary>], iteration_bounds = array<i64: 8>, scalar_prefetch = 0 : i64, scratch_operands = 2 : i64, tpu.core_type = #tpu.core_type<tc>, window_params = [{transform_indices = @transform_0, window_bounds = array<i64: 1, 8, 128>}, {pipeline_mode = #tpu.pipeline_mode<synchronous>, transform_indices = @transform_1, window_bounds = array<i64: 2, 2, 128>}, {pipeline_mode = #tpu.pipeline_mode<synchronous>, transform_indices = @transform_2, window_bounds = array<i64: 128, 256>}, {pipeline_mode = #tpu.pipeline_mode<synchronous>, transform_indices = @transform_3, window_bounds = array<i64: 384, 128>}, {pipeline_mode = #tpu.pipeline_mode<synchronous>, transform_indices = @transform_4, window_bounds = array<i64: 1, 128>}, {pipeline_mode = #tpu.pipeline_mode<synchronous>, transform_indices = @transform_5, window_bounds = array<i64: 1, 128>}, {pipeline_mode = #tpu.pipeline_mode<synchronous>, transform_indices = @transform_6, window_bounds = array<i64: 1, 128>}, {pipeline_mode = #tpu.pipeline_mode<synchronous>, transform_indices = @transform_7, window_bounds = array<i64: 384, 64>}, {pipeline_mode = #tpu.pipeline_mode<synchronous>, transform_indices = @transform_8, window_bounds = array<i64: 1, 64>}, {pipeline_mode = #tpu.pipeline_mode<synchronous>, transform_indices = @transform_9, window_bounds = array<i64: 1, 64>}, {pipeline_mode = #tpu.pipeline_mode<synchronous>, transform_indices = @transform_10, window_bounds = array<i64: 1, 64>}, {pipeline_mode = #tpu.pipeline_mode<synchronous>, transform_indices = @transform_11, window_bounds = array<i64: 192, 64>}, {pipeline_mode = #tpu.pipeline_mode<synchronous>, transform_indices = @transform_12, window_bounds = array<i64: 1, 64>}, {pipeline_mode = #tpu.pipeline_mode<synchronous>, transform_indices = @transform_13, window_bounds = array<i64: 1, 64>}, {pipeline_mode = #tpu.pipeline_mode<synchronous>, transform_indices = @transform_14, window_bounds = array<i64: 1, 64>}, {pipeline_mode = #tpu.pipeline_mode<synchronous>, transform_indices = @transform_15, window_bounds = array<i64: 192, 128>}, {pipeline_mode = #tpu.pipeline_mode<synchronous>, transform_indices = @transform_16, window_bounds = array<i64: 1, 128>}, {pipeline_mode = #tpu.pipeline_mode<synchronous>, transform_indices = @transform_17, window_bounds = array<i64: 1, 128>}, {pipeline_mode = #tpu.pipeline_mode<synchronous>, transform_indices = @transform_18, window_bounds = array<i64: 1, 128>}, {pipeline_mode = #tpu.pipeline_mode<synchronous>, transform_indices = @transform_19, window_bounds = array<i64: 256, 512>}, {pipeline_mode = #tpu.pipeline_mode<synchronous>, transform_indices = @transform_20, window_bounds = array<i64: 1, 512>}, {pipeline_mode = #tpu.pipeline_mode<synchronous>, transform_indices = @transform_21, window_bounds = array<i64: 128, 1>}, {pipeline_mode = #tpu.pipeline_mode<synchronous>, transform_indices = @transform_22, window_bounds = array<i64: 1, 1>}, {transform_indices = @transform_23, window_bounds = array<i64: 1, 2, 1>}, {pipeline_mode = #tpu.pipeline_mode<synchronous>, transform_indices = @transform_24, window_bounds = array<i64: 2, 2, 128>}]} {
    %c0_i32 = arith.constant 0 : i32
    %0 = arith.cmpi eq, %arg0, %c0_i32 : i32
    %1 = arith.extui %0 : i1 to i32
    %c0_i32_0 = arith.constant 0 : i32
    %2 = arith.cmpi ne, %1, %c0_i32_0 : i32
    scf.if %2 {
      %c0_100 = arith.constant 0 : index
      %c0_101 = arith.constant 0 : index
      %c0_102 = arith.constant 0 : index
      %224 = vector.load %arg2[%c0_100, %c0_101, %c0_102] : memref<2x2x128xf32, #tpu.memory_space<vmem>>, vector<1x2x128xf32>
      %225 = vector.shape_cast %224 : vector<1x2x128xf32> to vector<2x128xf32>
      %c0_103 = arith.constant 0 : index
      %c0_104 = arith.constant 0 : index
      %226 = vector.load %arg26[%c0_103, %c0_104] : memref<2x128xf32, #tpu.memory_space<vmem>>, vector<2x128xf32>
      tpu.vector_store %arg26[%c0_103, %c0_104], %225 {strides = array<i32>} : memref<2x128xf32, #tpu.memory_space<vmem>>, vector<2x128xf32>,
      %c1 = arith.constant 1 : index
      %c0_105 = arith.constant 0 : index
      %c0_106 = arith.constant 0 : index
      %227 = vector.load %arg2[%c1, %c0_105, %c0_106] : memref<2x2x128xf32, #tpu.memory_space<vmem>>, vector<1x2x128xf32>
      %228 = vector.shape_cast %227 : vector<1x2x128xf32> to vector<2x128xf32>
      %c0_107 = arith.constant 0 : index
      %c0_108 = arith.constant 0 : index
      %229 = vector.load %arg27[%c0_107, %c0_108] : memref<2x128xf32, #tpu.memory_space<vmem>>, vector<2x128xf32>
      tpu.vector_store %arg27[%c0_107, %c0_108], %228 {strides = array<i32>} : memref<2x128xf32, #tpu.memory_space<vmem>>, vector<2x128xf32>,
    } else {
    }
    %c0 = arith.constant 0 : index
    %c0_1 = arith.constant 0 : index
    %c0_2 = arith.constant 0 : index
    %3 = vector.load %arg1[%c0, %c0_1, %c0_2] : memref<1x8x128xf32, #tpu.memory_space<vmem>>, vector<1x8x128xf32>
    %4 = vector.shape_cast %3 : vector<1x8x128xf32> to vector<8x128xf32>
    %c0_3 = arith.constant 0 : index
    %c0_4 = arith.constant 0 : index
    %5 = vector.load %arg3[%c0_3, %c0_4] : memref<128x256xf32, #tpu.memory_space<vmem>>, vector<128x256xf32>
    %cst = arith.constant dense<0.000000e+00> : vector<8x256xf32>
    %6 = tpu.matmul %4, %5, %cst {dimension_numbers = #tpu.dot_dimension_numbers<[1], [0], [0], [1], [0, 0, 1, 1], [], []>} : vector<8x128xf32>, vector<128x256xf32>, vector<8x256xf32> -> vector<8x256xf32>
    %7 = vector.extract_strided_slice %6 {offsets = [0, 0], sizes = [8, 128], strides = [1, 1]} : vector<8x256xf32> to vector<8x128xf32>
    %8 = vector.extract_strided_slice %6 {offsets = [0, 128], sizes = [8, 128], strides = [1, 1]} : vector<8x256xf32> to vector<8x128xf32>
    %9 = arith.mulf %7, %7 : vector<8x128xf32>
    %10 = arith.mulf %8, %8 : vector<8x128xf32>
    %11 = arith.addf %9, %10 : vector<8x128xf32>
    %12 = math.sqrt %11 : vector<8x128xf32>
    %cst_5 = arith.constant 0.000000e+00 : f32
    %13 = vector.broadcast %cst_5 : f32 to vector<2x128xf32>
    %14 = tpu.concatenate %13, %12, %13 in 0 : vector<2x128xf32>, vector<8x128xf32>, vector<2x128xf32> -> vector<12x128xf32>
    %15 = vector.extract_strided_slice %14 {offsets = [0, 0], sizes = [8, 128], strides = [1, 1]} : vector<12x128xf32> to vector<8x128xf32>
    %16 = vector.extract_strided_slice %14 {offsets = [2, 0], sizes = [8, 128], strides = [1, 1]} : vector<12x128xf32> to vector<8x128xf32>
    %17 = vector.extract_strided_slice %14 {offsets = [4, 0], sizes = [8, 128], strides = [1, 1]} : vector<12x128xf32> to vector<8x128xf32>
    %18 = tpu.concatenate %15, %16, %17 in 1 : vector<8x128xf32>, vector<8x128xf32>, vector<8x128xf32> -> vector<8x384xf32>
    %c0_6 = arith.constant 0 : index
    %c0_7 = arith.constant 0 : index
    %19 = vector.load %arg4[%c0_6, %c0_7] : memref<384x128xf32, #tpu.memory_space<vmem>>, vector<384x128xf32>
    %cst_8 = arith.constant dense<0.000000e+00> : vector<8x128xf32>
    %20 = tpu.matmul %18, %19, %cst_8 {dimension_numbers = #tpu.dot_dimension_numbers<[1], [0], [0], [1], [0, 0, 1, 1], [], []>} : vector<8x384xf32>, vector<384x128xf32>, vector<8x128xf32> -> vector<8x128xf32>
    %c0_9 = arith.constant 0 : index
    %c0_10 = arith.constant 0 : index
    %21 = vector.load %arg5[%c0_9, %c0_10] : memref<1x128xf32, #tpu.memory_space<vmem>>, vector<1x128xf32>
    %22 = vector.broadcast %21 : vector<1x128xf32> to vector<8x128xf32>
    %23 = arith.addf %20, %22 : vector<8x128xf32>
    %cst_11 = arith.constant dense<0.000000e+00> : vector<128xf32>
    %24 = vector.multi_reduction <add>, %23, %cst_11 [0] : vector<8x128xf32> to vector<128xf32>
    %25 = vector.shape_cast %24 : vector<128xf32> to vector<1x128xf32>
    %cst_12 = arith.constant 8.000000e+00 : f32
    %26 = vector.broadcast %cst_12 : f32 to vector<1x128xf32>
    %27 = arith.divf %25, %26 : vector<1x128xf32>
    %28 = arith.mulf %23, %23 : vector<8x128xf32>
    %cst_13 = arith.constant dense<0.000000e+00> : vector<128xf32>
    %29 = vector.multi_reduction <add>, %28, %cst_13 [0] : vector<8x128xf32> to vector<128xf32>
    %30 = vector.shape_cast %29 : vector<128xf32> to vector<1x128xf32>
    %cst_14 = arith.constant 8.000000e+00 : f32
    %31 = vector.broadcast %cst_14 : f32 to vector<1x128xf32>
    %32 = arith.divf %30, %31 : vector<1x128xf32>
    %33 = arith.mulf %27, %27 : vector<1x128xf32>
    %34 = arith.subf %32, %33 : vector<1x128xf32>
    %cst_15 = arith.constant 0.000000e+00 : f32
    %35 = vector.broadcast %cst_15 : f32 to vector<1x128xf32>
    %36 = arith.maximumf %34, %35 : vector<1x128xf32>
    %37 = vector.broadcast %27 : vector<1x128xf32> to vector<8x128xf32>
    %38 = arith.subf %23, %37 : vector<8x128xf32>
    %c0_16 = arith.constant 0 : index
    %c0_17 = arith.constant 0 : index
    %39 = vector.load %arg6[%c0_16, %c0_17] : memref<1x128xf32, #tpu.memory_space<vmem>>, vector<1x128xf32>
    %cst_18 = arith.constant 9.99999974E-6 : f32
    %40 = vector.broadcast %cst_18 : f32 to vector<1x128xf32>
    %41 = arith.addf %36, %40 : vector<1x128xf32>
    %42 = math.rsqrt %41 : vector<1x128xf32>
    %43 = arith.mulf %39, %42 : vector<1x128xf32>
    %44 = vector.broadcast %43 : vector<1x128xf32> to vector<8x128xf32>
    %45 = arith.mulf %38, %44 : vector<8x128xf32>
    %c0_19 = arith.constant 0 : index
    %c0_20 = arith.constant 0 : index
    %46 = vector.load %arg7[%c0_19, %c0_20] : memref<1x128xf32, #tpu.memory_space<vmem>>, vector<1x128xf32>
    %47 = vector.broadcast %46 : vector<1x128xf32> to vector<8x128xf32>
    %48 = arith.addf %45, %47 : vector<8x128xf32>
    %cst_21 = arith.constant 0.000000e+00 : f32
    %49 = vector.broadcast %cst_21 : f32 to vector<8x128xf32>
    %50 = arith.maximumf %48, %49 : vector<8x128xf32>
    %cst_22 = arith.constant 0.000000e+00 : f32
    %51 = vector.broadcast %cst_22 : f32 to vector<2x128xf32>
    %52 = tpu.concatenate %51, %50, %51 in 0 : vector<2x128xf32>, vector<8x128xf32>, vector<2x128xf32> -> vector<12x128xf32>
    %53 = vector.extract_strided_slice %52 {offsets = [0, 0], sizes = [2, 128], strides = [1, 1]} : vector<12x128xf32> to vector<2x128xf32>
    %54 = vector.extract_strided_slice %52 {offsets = [4, 0], sizes = [2, 128], strides = [1, 1]} : vector<12x128xf32> to vector<2x128xf32>
    %55 = tpu.concatenate %53, %54 in 0 : vector<2x128xf32>, vector<2x128xf32> -> vector<4x128xf32>
    %56 = vector.extract_strided_slice %52 {offsets = [2, 0], sizes = [2, 128], strides = [1, 1]} : vector<12x128xf32> to vector<2x128xf32>
    %57 = vector.extract_strided_slice %52 {offsets = [6, 0], sizes = [2, 128], strides = [1, 1]} : vector<12x128xf32> to vector<2x128xf32>
    %58 = tpu.concatenate %56, %57 in 0 : vector<2x128xf32>, vector<2x128xf32> -> vector<4x128xf32>
    %59 = vector.extract_strided_slice %52 {offsets = [4, 0], sizes = [2, 128], strides = [1, 1]} : vector<12x128xf32> to vector<2x128xf32>
    %60 = vector.extract_strided_slice %52 {offsets = [8, 0], sizes = [2, 128], strides = [1, 1]} : vector<12x128xf32> to vector<2x128xf32>
    %61 = tpu.concatenate %59, %60 in 0 : vector<2x128xf32>, vector<2x128xf32> -> vector<4x128xf32>
    %62 = tpu.concatenate %55, %58, %61 in 1 : vector<4x128xf32>, vector<4x128xf32>, vector<4x128xf32> -> vector<4x384xf32>
    %c0_23 = arith.constant 0 : index
    %c0_24 = arith.constant 0 : index
    %63 = vector.load %arg8[%c0_23, %c0_24] : memref<384x64xf32, #tpu.memory_space<vmem>>, vector<384x64xf32>
    %cst_25 = arith.constant dense<0.000000e+00> : vector<4x64xf32>
    %64 = tpu.matmul %62, %63, %cst_25 {dimension_numbers = #tpu.dot_dimension_numbers<[1], [0], [0], [1], [0, 0, 1, 1], [], []>} : vector<4x384xf32>, vector<384x64xf32>, vector<4x64xf32> -> vector<4x64xf32>
    %c0_26 = arith.constant 0 : index
    %c0_27 = arith.constant 0 : index
    %65 = vector.load %arg9[%c0_26, %c0_27] : memref<1x64xf32, #tpu.memory_space<vmem>>, vector<1x64xf32>
    %66 = vector.broadcast %65 : vector<1x64xf32> to vector<4x64xf32>
    %67 = arith.addf %64, %66 : vector<4x64xf32>
    %cst_28 = arith.constant dense<0.000000e+00> : vector<64xf32>
    %68 = vector.multi_reduction <add>, %67, %cst_28 [0] : vector<4x64xf32> to vector<64xf32>
    %69 = vector.shape_cast %68 : vector<64xf32> to vector<1x64xf32>
    %cst_29 = arith.constant 4.000000e+00 : f32
    %70 = vector.broadcast %cst_29 : f32 to vector<1x64xf32>
    %71 = arith.divf %69, %70 : vector<1x64xf32>
    %72 = arith.mulf %67, %67 : vector<4x64xf32>
    %cst_30 = arith.constant dense<0.000000e+00> : vector<64xf32>
    %73 = vector.multi_reduction <add>, %72, %cst_30 [0] : vector<4x64xf32> to vector<64xf32>
    %74 = vector.shape_cast %73 : vector<64xf32> to vector<1x64xf32>
    %cst_31 = arith.constant 4.000000e+00 : f32
    %75 = vector.broadcast %cst_31 : f32 to vector<1x64xf32>
    %76 = arith.divf %74, %75 : vector<1x64xf32>
    %77 = arith.mulf %71, %71 : vector<1x64xf32>
    %78 = arith.subf %76, %77 : vector<1x64xf32>
    %cst_32 = arith.constant 0.000000e+00 : f32
    %79 = vector.broadcast %cst_32 : f32 to vector<1x64xf32>
    %80 = arith.maximumf %78, %79 : vector<1x64xf32>
    %81 = vector.broadcast %71 : vector<1x64xf32> to vector<4x64xf32>
    %82 = arith.subf %67, %81 : vector<4x64xf32>
    %c0_33 = arith.constant 0 : index
    %c0_34 = arith.constant 0 : index
    %83 = vector.load %arg10[%c0_33, %c0_34] : memref<1x64xf32, #tpu.memory_space<vmem>>, vector<1x64xf32>
    %cst_35 = arith.constant 9.99999974E-6 : f32
    %84 = vector.broadcast %cst_35 : f32 to vector<1x64xf32>
    %85 = arith.addf %80, %84 : vector<1x64xf32>
    %86 = math.rsqrt %85 : vector<1x64xf32>
    %87 = arith.mulf %83, %86 : vector<1x64xf32>
    %88 = vector.broadcast %87 : vector<1x64xf32> to vector<4x64xf32>
    %89 = arith.mulf %82, %88 : vector<4x64xf32>
    %c0_36 = arith.constant 0 : index
    %c0_37 = arith.constant 0 : index
    %90 = vector.load %arg11[%c0_36, %c0_37] : memref<1x64xf32, #tpu.memory_space<vmem>>, vector<1x64xf32>
    %91 = vector.broadcast %90 : vector<1x64xf32> to vector<4x64xf32>
    %92 = arith.addf %89, %91 : vector<4x64xf32>
    %cst_38 = arith.constant 0.000000e+00 : f32
    %93 = vector.broadcast %cst_38 : f32 to vector<4x64xf32>
    %94 = arith.maximumf %92, %93 : vector<4x64xf32>
    %cst_39 = arith.constant 0.000000e+00 : f32
    %95 = vector.broadcast %cst_39 : f32 to vector<2x64xf32>
    %96 = tpu.concatenate %95, %94, %95 in 0 : vector<2x64xf32>, vector<4x64xf32>, vector<2x64xf32> -> vector<8x64xf32>
    %97 = vector.extract_strided_slice %96 {offsets = [0, 0], sizes = [2, 64], strides = [1, 1]} : vector<8x64xf32> to vector<2x64xf32>
    %98 = vector.extract_strided_slice %96 {offsets = [2, 0], sizes = [2, 64], strides = [1, 1]} : vector<8x64xf32> to vector<2x64xf32>
    %99 = vector.extract_strided_slice %96 {offsets = [4, 0], sizes = [2, 64], strides = [1, 1]} : vector<8x64xf32> to vector<2x64xf32>
    %100 = tpu.concatenate %97, %98, %99 in 1 : vector<2x64xf32>, vector<2x64xf32>, vector<2x64xf32> -> vector<2x192xf32>
    %c0_40 = arith.constant 0 : index
    %c0_41 = arith.constant 0 : index
    %101 = vector.load %arg12[%c0_40, %c0_41] : memref<192x64xf32, #tpu.memory_space<vmem>>, vector<192x64xf32>
    %cst_42 = arith.constant dense<0.000000e+00> : vector<2x64xf32>
    %102 = tpu.matmul %100, %101, %cst_42 {dimension_numbers = #tpu.dot_dimension_numbers<[1], [0], [0], [1], [0, 0, 1, 1], [], []>} : vector<2x192xf32>, vector<192x64xf32>, vector<2x64xf32> -> vector<2x64xf32>
    %c0_43 = arith.constant 0 : index
    %c0_44 = arith.constant 0 : index
    %103 = vector.load %arg13[%c0_43, %c0_44] : memref<1x64xf32, #tpu.memory_space<vmem>>, vector<1x64xf32>
    %104 = vector.broadcast %103 : vector<1x64xf32> to vector<2x64xf32>
    %105 = arith.addf %102, %104 : vector<2x64xf32>
    %cst_45 = arith.constant dense<0.000000e+00> : vector<64xf32>
    %106 = vector.multi_reduction <add>, %105, %cst_45 [0] : vector<2x64xf32> to vector<64xf32>
    %107 = vector.shape_cast %106 : vector<64xf32> to vector<1x64xf32>
    %cst_46 = arith.constant 2.000000e+00 : f32
    %108 = vector.broadcast %cst_46 : f32 to vector<1x64xf32>
    %109 = arith.divf %107, %108 : vector<1x64xf32>
    %110 = arith.mulf %105, %105 : vector<2x64xf32>
    %cst_47 = arith.constant dense<0.000000e+00> : vector<64xf32>
    %111 = vector.multi_reduction <add>, %110, %cst_47 [0] : vector<2x64xf32> to vector<64xf32>
    %112 = vector.shape_cast %111 : vector<64xf32> to vector<1x64xf32>
    %cst_48 = arith.constant 2.000000e+00 : f32
    %113 = vector.broadcast %cst_48 : f32 to vector<1x64xf32>
    %114 = arith.divf %112, %113 : vector<1x64xf32>
    %115 = arith.mulf %109, %109 : vector<1x64xf32>
    %116 = arith.subf %114, %115 : vector<1x64xf32>
    %cst_49 = arith.constant 0.000000e+00 : f32
    %117 = vector.broadcast %cst_49 : f32 to vector<1x64xf32>
    %118 = arith.maximumf %116, %117 : vector<1x64xf32>
    %119 = vector.broadcast %109 : vector<1x64xf32> to vector<2x64xf32>
    %120 = arith.subf %105, %119 : vector<2x64xf32>
    %c0_50 = arith.constant 0 : index
    %c0_51 = arith.constant 0 : index
    %121 = vector.load %arg14[%c0_50, %c0_51] : memref<1x64xf32, #tpu.memory_space<vmem>>, vector<1x64xf32>
    %cst_52 = arith.constant 9.99999974E-6 : f32
    %122 = vector.broadcast %cst_52 : f32 to vector<1x64xf32>
    %123 = arith.addf %118, %122 : vector<1x64xf32>
    %124 = math.rsqrt %123 : vector<1x64xf32>
    %125 = arith.mulf %121, %124 : vector<1x64xf32>
    %126 = vector.broadcast %125 : vector<1x64xf32> to vector<2x64xf32>
    %127 = arith.mulf %120, %126 : vector<2x64xf32>
    %c0_53 = arith.constant 0 : index
    %c0_54 = arith.constant 0 : index
    %128 = vector.load %arg15[%c0_53, %c0_54] : memref<1x64xf32, #tpu.memory_space<vmem>>, vector<1x64xf32>
    %129 = vector.broadcast %128 : vector<1x64xf32> to vector<2x64xf32>
    %130 = arith.addf %127, %129 : vector<2x64xf32>
    %cst_55 = arith.constant 0.000000e+00 : f32
    %131 = vector.broadcast %cst_55 : f32 to vector<2x64xf32>
    %132 = arith.maximumf %130, %131 : vector<2x64xf32>
    %cst_56 = arith.constant 0.000000e+00 : f32
    %133 = vector.broadcast %cst_56 : f32 to vector<2x64xf32>
    %134 = tpu.concatenate %133, %132, %133 in 0 : vector<2x64xf32>, vector<2x64xf32>, vector<2x64xf32> -> vector<6x64xf32>
    %135 = vector.extract_strided_slice %134 {offsets = [0, 0], sizes = [2, 64], strides = [1, 1]} : vector<6x64xf32> to vector<2x64xf32>
    %136 = vector.extract_strided_slice %134 {offsets = [2, 0], sizes = [2, 64], strides = [1, 1]} : vector<6x64xf32> to vector<2x64xf32>
    %137 = vector.extract_strided_slice %134 {offsets = [4, 0], sizes = [2, 64], strides = [1, 1]} : vector<6x64xf32> to vector<2x64xf32>
    %138 = tpu.concatenate %135, %136, %137 in 1 : vector<2x64xf32>, vector<2x64xf32>, vector<2x64xf32> -> vector<2x192xf32>
    %c0_57 = arith.constant 0 : index
    %c0_58 = arith.constant 0 : index
    %139 = vector.load %arg16[%c0_57, %c0_58] : memref<192x128xf32, #tpu.memory_space<vmem>>, vector<192x128xf32>
    %cst_59 = arith.constant dense<0.000000e+00> : vector<2x128xf32>
    %140 = tpu.matmul %138, %139, %cst_59 {dimension_numbers = #tpu.dot_dimension_numbers<[1], [0], [0], [1], [0, 0, 1, 1], [], []>} : vector<2x192xf32>, vector<192x128xf32>, vector<2x128xf32> -> vector<2x128xf32>
    %c0_60 = arith.constant 0 : index
    %c0_61 = arith.constant 0 : index
    %141 = vector.load %arg17[%c0_60, %c0_61] : memref<1x128xf32, #tpu.memory_space<vmem>>, vector<1x128xf32>
    %142 = vector.broadcast %141 : vector<1x128xf32> to vector<2x128xf32>
    %143 = arith.addf %140, %142 : vector<2x128xf32>
    %cst_62 = arith.constant dense<0.000000e+00> : vector<128xf32>
    %144 = vector.multi_reduction <add>, %143, %cst_62 [0] : vector<2x128xf32> to vector<128xf32>
    %145 = vector.shape_cast %144 : vector<128xf32> to vector<1x128xf32>
    %cst_63 = arith.constant 2.000000e+00 : f32
    %146 = vector.broadcast %cst_63 : f32 to vector<1x128xf32>
    %147 = arith.divf %145, %146 : vector<1x128xf32>
    %148 = arith.mulf %143, %143 : vector<2x128xf32>
    %cst_64 = arith.constant dense<0.000000e+00> : vector<128xf32>
    %149 = vector.multi_reduction <add>, %148, %cst_64 [0] : vector<2x128xf32> to vector<128xf32>
    %150 = vector.shape_cast %149 : vector<128xf32> to vector<1x128xf32>
    %cst_65 = arith.constant 2.000000e+00 : f32
    %151 = vector.broadcast %cst_65 : f32 to vector<1x128xf32>
    %152 = arith.divf %150, %151 : vector<1x128xf32>
    %153 = arith.mulf %147, %147 : vector<1x128xf32>
    %154 = arith.subf %152, %153 : vector<1x128xf32>
    %cst_66 = arith.constant 0.000000e+00 : f32
    %155 = vector.broadcast %cst_66 : f32 to vector<1x128xf32>
    %156 = arith.maximumf %154, %155 : vector<1x128xf32>
    %157 = vector.broadcast %147 : vector<1x128xf32> to vector<2x128xf32>
    %158 = arith.subf %143, %157 : vector<2x128xf32>
    %c0_67 = arith.constant 0 : index
    %c0_68 = arith.constant 0 : index
    %159 = vector.load %arg18[%c0_67, %c0_68] : memref<1x128xf32, #tpu.memory_space<vmem>>, vector<1x128xf32>
    %cst_69 = arith.constant 9.99999974E-6 : f32
    %160 = vector.broadcast %cst_69 : f32 to vector<1x128xf32>
    %161 = arith.addf %156, %160 : vector<1x128xf32>
    %162 = math.rsqrt %161 : vector<1x128xf32>
    %163 = arith.mulf %159, %162 : vector<1x128xf32>
    %164 = vector.broadcast %163 : vector<1x128xf32> to vector<2x128xf32>
    %165 = arith.mulf %158, %164 : vector<2x128xf32>
    %c0_70 = arith.constant 0 : index
    %c0_71 = arith.constant 0 : index
    %166 = vector.load %arg19[%c0_70, %c0_71] : memref<1x128xf32, #tpu.memory_space<vmem>>, vector<1x128xf32>
    %167 = vector.broadcast %166 : vector<1x128xf32> to vector<2x128xf32>
    %168 = arith.addf %165, %167 : vector<2x128xf32>
    %cst_72 = arith.constant 0.000000e+00 : f32
    %169 = vector.broadcast %cst_72 : f32 to vector<2x128xf32>
    %170 = arith.maximumf %168, %169 : vector<2x128xf32>
    %c0_73 = arith.constant 0 : index
    %c0_74 = arith.constant 0 : index
    %171 = vector.load %arg26[%c0_73, %c0_74] : memref<2x128xf32, #tpu.memory_space<vmem>>, vector<2x128xf32>
    %c0_75 = arith.constant 0 : index
    %c0_76 = arith.constant 0 : index
    %172 = vector.load %arg27[%c0_75, %c0_76] : memref<2x128xf32, #tpu.memory_space<vmem>>, vector<2x128xf32>
    %173 = tpu.concatenate %170, %171 in 1 : vector<2x128xf32>, vector<2x128xf32> -> vector<2x256xf32>
    %c0_77 = arith.constant 0 : index
    %c0_78 = arith.constant 0 : index
    %174 = vector.load %arg20[%c0_77, %c0_78] : memref<256x512xf32, #tpu.memory_space<vmem>>, vector<256x512xf32>
    %cst_79 = arith.constant dense<0.000000e+00> : vector<2x512xf32>
    %175 = tpu.matmul %173, %174, %cst_79 {dimension_numbers = #tpu.dot_dimension_numbers<[1], [0], [0], [1], [0, 0, 1, 1], [], []>} : vector<2x256xf32>, vector<256x512xf32>, vector<2x512xf32> -> vector<2x512xf32>
    %c0_80 = arith.constant 0 : index
    %c0_81 = arith.constant 0 : index
    %176 = vector.load %arg21[%c0_80, %c0_81] : memref<1x512xf32, #tpu.memory_space<vmem>>, vector<1x512xf32>
    %177 = vector.broadcast %176 : vector<1x512xf32> to vector<2x512xf32>
    %178 = arith.addf %175, %177 : vector<2x512xf32>
    %179 = vector.extract_strided_slice %178 {offsets = [0, 0], sizes = [2, 128], strides = [1, 1]} : vector<2x512xf32> to vector<2x128xf32>
    %180 = arith.negf %179 : vector<2x128xf32>
    %181 = math.exp %180 : vector<2x128xf32>
    %cst_82 = arith.constant 1.000000e+00 : f32
    %182 = vector.broadcast %cst_82 : f32 to vector<2x128xf32>
    %183 = arith.addf %182, %181 : vector<2x128xf32>
    %184 = arith.divf %182, %183 : vector<2x128xf32>
    %185 = vector.extract_strided_slice %178 {offsets = [0, 128], sizes = [2, 128], strides = [1, 1]} : vector<2x512xf32> to vector<2x128xf32>
    %186 = arith.negf %185 : vector<2x128xf32>
    %187 = math.exp %186 : vector<2x128xf32>
    %cst_83 = arith.constant 1.000000e+00 : f32
    %188 = vector.broadcast %cst_83 : f32 to vector<2x128xf32>
    %189 = arith.addf %188, %187 : vector<2x128xf32>
    %190 = arith.divf %188, %189 : vector<2x128xf32>
    %191 = vector.extract_strided_slice %178 {offsets = [0, 256], sizes = [2, 128], strides = [1, 1]} : vector<2x512xf32> to vector<2x128xf32>
    %192 = math.tanh %191 : vector<2x128xf32>
    %193 = vector.extract_strided_slice %178 {offsets = [0, 384], sizes = [2, 128], strides = [1, 1]} : vector<2x512xf32> to vector<2x128xf32>
    %194 = arith.negf %193 : vector<2x128xf32>
    %195 = math.exp %194 : vector<2x128xf32>
    %cst_84 = arith.constant 1.000000e+00 : f32
    %196 = vector.broadcast %cst_84 : f32 to vector<2x128xf32>
    %197 = arith.addf %196, %195 : vector<2x128xf32>
    %198 = arith.divf %196, %197 : vector<2x128xf32>
    %199 = arith.mulf %190, %172 : vector<2x128xf32>
    %200 = arith.mulf %184, %192 : vector<2x128xf32>
    %201 = arith.addf %199, %200 : vector<2x128xf32>
    %202 = math.tanh %201 : vector<2x128xf32>
    %203 = arith.mulf %198, %202 : vector<2x128xf32>
    %c0_85 = arith.constant 0 : index
    %c0_86 = arith.constant 0 : index
    %204 = vector.load %arg26[%c0_85, %c0_86] : memref<2x128xf32, #tpu.memory_space<vmem>>, vector<2x128xf32>
    tpu.vector_store %arg26[%c0_85, %c0_86], %203 {strides = array<i32>} : memref<2x128xf32, #tpu.memory_space<vmem>>, vector<2x128xf32>,
    %c0_87 = arith.constant 0 : index
    %c0_88 = arith.constant 0 : index
    %205 = vector.load %arg27[%c0_87, %c0_88] : memref<2x128xf32, #tpu.memory_space<vmem>>, vector<2x128xf32>
    tpu.vector_store %arg27[%c0_87, %c0_88], %201 {strides = array<i32>} : memref<2x128xf32, #tpu.memory_space<vmem>>, vector<2x128xf32>,
    %cst_89 = arith.constant 0.000000e+00 : f32
    %206 = vector.broadcast %cst_89 : f32 to vector<2x128xf32>
    %207 = arith.maximumf %203, %206 : vector<2x128xf32>
    %c0_90 = arith.constant 0 : index
    %c0_91 = arith.constant 0 : index
    %208 = vector.load %arg22[%c0_90, %c0_91] : memref<128x1xf32, #tpu.memory_space<vmem>>, vector<128x1xf32>
    %cst_92 = arith.constant dense<0.000000e+00> : vector<2x1xf32>
    %209 = tpu.matmul %207, %208, %cst_92 {dimension_numbers = #tpu.dot_dimension_numbers<[1], [0], [0], [1], [0, 0, 1, 1], [], []>} : vector<2x128xf32>, vector<128x1xf32>, vector<2x1xf32> -> vector<2x1xf32>
    %c0_93 = arith.constant 0 : index
    %c0_94 = arith.constant 0 : index
    %210 = vector.load %arg23[%c0_93, %c0_94] : memref<1x1xf32, #tpu.memory_space<vmem>>, vector<1x1xf32>
    %211 = vector.broadcast %210 : vector<1x1xf32> to vector<2x1xf32>
    %212 = arith.addf %209, %211 : vector<2x1xf32>
    %213 = arith.negf %212 : vector<2x1xf32>
    %214 = math.exp %213 : vector<2x1xf32>
    %cst_95 = arith.constant 1.000000e+00 : f32
    %215 = vector.broadcast %cst_95 : f32 to vector<2x1xf32>
    %216 = arith.addf %215, %214 : vector<2x1xf32>
    %217 = arith.divf %215, %216 : vector<2x1xf32>
    %c0_96 = arith.constant 0 : index
    %c0_97 = arith.constant 0 : index
    %c0_98 = arith.constant 0 : index
    %218 = vector.load %arg24[%c0_96, %c0_97, %c0_98] : memref<1x2x1xf32, #tpu.memory_space<vmem>>, vector<1x2x1xf32>
    %219 = vector.shape_cast %218 : vector<1x2x1xf32> to vector<2x1xf32>
    %220 = vector.shape_cast %217 : vector<2x1xf32> to vector<1x2x1xf32>
    tpu.vector_store %arg24[%c0_96, %c0_97, %c0_98], %220 {strides = array<i32>} : memref<1x2x1xf32, #tpu.memory_space<vmem>>, vector<1x2x1xf32>,
    %c7_i32 = arith.constant 7 : i32
    %221 = arith.cmpi eq, %arg0, %c7_i32 : i32
    %222 = arith.extui %221 : i1 to i32
    %c0_i32_99 = arith.constant 0 : i32
    %223 = arith.cmpi ne, %222, %c0_i32_99 : i32
    scf.if %223 {
      %c0_100 = arith.constant 0 : index
      %c0_101 = arith.constant 0 : index
      %c0_102 = arith.constant 0 : index
      %224 = vector.load %arg25[%c0_100, %c0_101, %c0_102] : memref<2x2x128xf32, #tpu.memory_space<vmem>>, vector<1x2x128xf32>
      %225 = vector.shape_cast %224 : vector<1x2x128xf32> to vector<2x128xf32>
      %226 = vector.shape_cast %203 : vector<2x128xf32> to vector<1x2x128xf32>
      tpu.vector_store %arg25[%c0_100, %c0_101, %c0_102], %226 {strides = array<i32>} : memref<2x2x128xf32, #tpu.memory_space<vmem>>, vector<1x2x128xf32>,
      %c1 = arith.constant 1 : index
      %c0_103 = arith.constant 0 : index
      %c0_104 = arith.constant 0 : index
      %227 = vector.load %arg25[%c1, %c0_103, %c0_104] : memref<2x2x128xf32, #tpu.memory_space<vmem>>, vector<1x2x128xf32>
      %228 = vector.shape_cast %227 : vector<1x2x128xf32> to vector<2x128xf32>
      %229 = vector.shape_cast %201 : vector<2x128xf32> to vector<1x2x128xf32>
      tpu.vector_store %arg25[%c1, %c0_103, %c0_104], %229 {strides = array<i32>} : memref<2x2x128xf32, #tpu.memory_space<vmem>>, vector<1x2x128xf32>,
    } else {
    }
    return
  }
  func.func @transform_0(%arg0: i32) -> (i32, i32, i32) {
    %c0_i32 = arith.constant 0 : i32
    %c0_i32_0 = arith.constant 0 : i32
    %c0_i32_1 = arith.constant 0 : i32
    return %arg0, %c0_i32, %c0_i32_0 : i32, i32, i32
  }
  func.func @transform_1(%arg0: i32) -> (i32, i32, i32) {
    %c0_i32 = arith.constant 0 : i32
    %c0_i32_0 = arith.constant 0 : i32
    %c0_i32_1 = arith.constant 0 : i32
    %c0_i32_2 = arith.constant 0 : i32
    return %c0_i32, %c0_i32_0, %c0_i32_1 : i32, i32, i32
  }
  func.func @transform_2(%arg0: i32) -> (i32, i32) {
    %c0_i32 = arith.constant 0 : i32
    %c0_i32_0 = arith.constant 0 : i32
    %c0_i32_1 = arith.constant 0 : i32
    return %c0_i32, %c0_i32_0 : i32, i32
  }
  func.func @transform_3(%arg0: i32) -> (i32, i32) {
    %c0_i32 = arith.constant 0 : i32
    %c0_i32_0 = arith.constant 0 : i32
    %c0_i32_1 = arith.constant 0 : i32
    return %c0_i32, %c0_i32_0 : i32, i32
  }
  func.func @transform_4(%arg0: i32) -> (i32, i32) {
    %c0_i32 = arith.constant 0 : i32
    %c0_i32_0 = arith.constant 0 : i32
    %c0_i32_1 = arith.constant 0 : i32
    return %c0_i32, %c0_i32_0 : i32, i32
  }
  func.func @transform_5(%arg0: i32) -> (i32, i32) {
    %c0_i32 = arith.constant 0 : i32
    %c0_i32_0 = arith.constant 0 : i32
    %c0_i32_1 = arith.constant 0 : i32
    return %c0_i32, %c0_i32_0 : i32, i32
  }
  func.func @transform_6(%arg0: i32) -> (i32, i32) {
    %c0_i32 = arith.constant 0 : i32
    %c0_i32_0 = arith.constant 0 : i32
    %c0_i32_1 = arith.constant 0 : i32
    return %c0_i32, %c0_i32_0 : i32, i32
  }
  func.func @transform_7(%arg0: i32) -> (i32, i32) {
    %c0_i32 = arith.constant 0 : i32
    %c0_i32_0 = arith.constant 0 : i32
    %c0_i32_1 = arith.constant 0 : i32
    return %c0_i32, %c0_i32_0 : i32, i32
  }
  func.func @transform_8(%arg0: i32) -> (i32, i32) {
    %c0_i32 = arith.constant 0 : i32
    %c0_i32_0 = arith.constant 0 : i32
    %c0_i32_1 = arith.constant 0 : i32
    return %c0_i32, %c0_i32_0 : i32, i32
  }
  func.func @transform_9(%arg0: i32) -> (i32, i32) {
    %c0_i32 = arith.constant 0 : i32
    %c0_i32_0 = arith.constant 0 : i32
    %c0_i32_1 = arith.constant 0 : i32
    return %c0_i32, %c0_i32_0 : i32, i32
  }
  func.func @transform_10(%arg0: i32) -> (i32, i32) {
    %c0_i32 = arith.constant 0 : i32
    %c0_i32_0 = arith.constant 0 : i32
    %c0_i32_1 = arith.constant 0 : i32
    return %c0_i32, %c0_i32_0 : i32, i32
  }
  func.func @transform_11(%arg0: i32) -> (i32, i32) {
    %c0_i32 = arith.constant 0 : i32
    %c0_i32_0 = arith.constant 0 : i32
    %c0_i32_1 = arith.constant 0 : i32
    return %c0_i32, %c0_i32_0 : i32, i32
  }
  func.func @transform_12(%arg0: i32) -> (i32, i32) {
    %c0_i32 = arith.constant 0 : i32
    %c0_i32_0 = arith.constant 0 : i32
    %c0_i32_1 = arith.constant 0 : i32
    return %c0_i32, %c0_i32_0 : i32, i32
  }
  func.func @transform_13(%arg0: i32) -> (i32, i32) {
    %c0_i32 = arith.constant 0 : i32
    %c0_i32_0 = arith.constant 0 : i32
    %c0_i32_1 = arith.constant 0 : i32
    return %c0_i32, %c0_i32_0 : i32, i32
  }
  func.func @transform_14(%arg0: i32) -> (i32, i32) {
    %c0_i32 = arith.constant 0 : i32
    %c0_i32_0 = arith.constant 0 : i32
    %c0_i32_1 = arith.constant 0 : i32
    return %c0_i32, %c0_i32_0 : i32, i32
  }
  func.func @transform_15(%arg0: i32) -> (i32, i32) {
    %c0_i32 = arith.constant 0 : i32
    %c0_i32_0 = arith.constant 0 : i32
    %c0_i32_1 = arith.constant 0 : i32
    return %c0_i32, %c0_i32_0 : i32, i32
  }
  func.func @transform_16(%arg0: i32) -> (i32, i32) {
    %c0_i32 = arith.constant 0 : i32
    %c0_i32_0 = arith.constant 0 : i32
    %c0_i32_1 = arith.constant 0 : i32
    return %c0_i32, %c0_i32_0 : i32, i32
  }
  func.func @transform_17(%arg0: i32) -> (i32, i32) {
    %c0_i32 = arith.constant 0 : i32
    %c0_i32_0 = arith.constant 0 : i32
    %c0_i32_1 = arith.constant 0 : i32
    return %c0_i32, %c0_i32_0 : i32, i32
  }
  func.func @transform_18(%arg0: i32) -> (i32, i32) {
    %c0_i32 = arith.constant 0 : i32
    %c0_i32_0 = arith.constant 0 : i32
    %c0_i32_1 = arith.constant 0 : i32
    return %c0_i32, %c0_i32_0 : i32, i32
  }
  func.func @transform_19(%arg0: i32) -> (i32, i32) {
    %c0_i32 = arith.constant 0 : i32
    %c0_i32_0 = arith.constant 0 : i32
    %c0_i32_1 = arith.constant 0 : i32
    return %c0_i32, %c0_i32_0 : i32, i32
  }
  func.func @transform_20(%arg0: i32) -> (i32, i32) {
    %c0_i32 = arith.constant 0 : i32
    %c0_i32_0 = arith.constant 0 : i32
    %c0_i32_1 = arith.constant 0 : i32
    return %c0_i32, %c0_i32_0 : i32, i32
  }
  func.func @transform_21(%arg0: i32) -> (i32, i32) {
    %c0_i32 = arith.constant 0 : i32
    %c0_i32_0 = arith.constant 0 : i32
    %c0_i32_1 = arith.constant 0 : i32
    return %c0_i32, %c0_i32_0 : i32, i32
  }
  func.func @transform_22(%arg0: i32) -> (i32, i32) {
    %c0_i32 = arith.constant 0 : i32
    %c0_i32_0 = arith.constant 0 : i32
    %c0_i32_1 = arith.constant 0 : i32
    return %c0_i32, %c0_i32_0 : i32, i32
  }
  func.func @transform_23(%arg0: i32) -> (i32, i32, i32) {
    %c0_i32 = arith.constant 0 : i32
    %c0_i32_0 = arith.constant 0 : i32
    %c0_i32_1 = arith.constant 0 : i32
    return %arg0, %c0_i32, %c0_i32_0 : i32, i32, i32
  }
  func.func @transform_24(%arg0: i32) -> (i32, i32, i32) {
    %c0_i32 = arith.constant 0 : i32
    %c0_i32_0 = arith.constant 0 : i32
    %c0_i32_1 = arith.constant 0 : i32
    %c0_i32_2 = arith.constant 0 : i32
    return %c0_i32, %c0_i32_0, %c0_i32_1 : i32, i32, i32
  }
}

</mosaic_0001>

<llo_original>
// kernel: silero_vad_forward.1
$region0: #{silero_vad_forward.1}
  #allocation0 [shape = 'u32[]', space=smem, size = 0x4, offset = 0x4, fixed_abs, tag = 'smem constant byte address 0x4 - core index']
  #allocation1 [shape = 'u32[144,128]{1,0:T(1,128)}', space=vmem, size = 0x12000, scoped, tag = 'internal scratch']
  #allocation2 [shape = 'f32[2,128]{1,0:T(2,128)}', space=vmem, size = 0x400, scoped, tag = 'scratch operand']
  #allocation3 [shape = 'f32[2,128]{1,0:T(2,128)}', space=vmem, size = 0x400, scoped, tag = 'scratch operand']
  #allocation4 [shape = 'f32[1,1]{1,0:T(1,128)S(1)}', space=vmem, size = 0x200, scoped, tag = 'scoped memory for silero_vad_forward.1']
  %s0 = inlined_call_operand.vmem [shape: f32[8,8,128], index: 0, kind: input, shape index: {}]
  %s1 = inlined_call_operand.vmem [shape: f32[2,2,128], index: 1, kind: input, shape index: {}]
  %s2 = inlined_call_operand.hbm [shape: f32[128,256], index: 2, kind: input, shape index: {}]
  %s3 = inlined_call_operand.vmem [shape: f32[384,128], index: 3, kind: input, shape index: {}]
  %s4 = inlined_call_operand.vmem [shape: f32[1,128], index: 4, kind: input, shape index: {}]
  %s5 = inlined_call_operand.vmem [shape: f32[1,128], index: 5, kind: input, shape index: {}]
  %s6 = inlined_call_operand.vmem [shape: f32[1,128], index: 6, kind: input, shape index: {}]
  %s7 = inlined_call_operand.vmem [shape: f32[384,64], index: 7, kind: input, shape index: {}]
  %s8 = inlined_call_operand.vmem [shape: f32[1,64], index: 8, kind: input, shape index: {}]
  %s9 = inlined_call_operand.vmem [shape: f32[1,64], index: 9, kind: input, shape index: {}]
  %s10 = inlined_call_operand.vmem [shape: f32[1,64], index: 10, kind: input, shape index: {}]
  %s11 = inlined_call_operand.vmem [shape: f32[192,64], index: 11, kind: input, shape index: {}]
  %s12 = inlined_call_operand.vmem [shape: f32[1,64], index: 12, kind: input, shape index: {}]
  %s13 = inlined_call_operand.vmem [shape: f32[1,64], index: 13, kind: input, shape index: {}]
  %s14 = inlined_call_operand.vmem [shape: f32[1,64], index: 14, kind: input, shape index: {}]
  %s15 = inlined_call_operand.hbm [shape: f32[192,128], index: 15, kind: input, shape index: {}]
  %s16 = inlined_call_operand.vmem [shape: f32[1,128], index: 16, kind: input, shape index: {}]
  %s17 = inlined_call_operand.vmem [shape: f32[1,128], index: 17, kind: input, shape index: {}]
  %s18 = inlined_call_operand.vmem [shape: f32[1,128], index: 18, kind: input, shape index: {}]
  %s19 = inlined_call_operand.vmem [shape: f32[256,512], index: 19, kind: input, shape index: {}]
  %s20 = inlined_call_operand.vmem [shape: f32[1,512], index: 20, kind: input, shape index: {}]
  %s21 = inlined_call_operand.vmem [shape: f32[128,1], index: 21, kind: input, shape index: {}]
  %s22 = inlined_call_operand.<no memory space> [shape: f32[1,1], index: 22, kind: input, shape index: {}]
  %s23 = inlined_call_operand.vmem [shape: f32[8,2,1], index: 23, kind: output, shape index: {0}]
  %s24 = inlined_call_operand.hbm [shape: f32[2,2,128], index: 24, kind: output, shape index: {1}]
  %25 = xla_tuple %s23, %s24
  %s26 = sld [smem:[#allocation0]]
  $region149: #{silero_vad_forward.1} parent=0
    _
  %s28 = ssub.s32 1, %s26
  %s29 = scalar_select 0, %s28, %s26
  %v30 = vstv %s22
  %31 = vst [vmem:[#allocation4] sm:$0x1] %v30
  $region1: #{silero_vad_forward.1} parent=0
    #allocation5 [shape = 'u8[131072]{0}', space=vmem, size = 0x20000, scoped, tag = 'input window, operand 2, single buffered']
    #allocation6 [shape = 's32[2]{0}', space=sflag, size = 0x8, scoped, tag = 'scoped memory for silero_vad_forward.1']
    #allocation7 [shape = 's32[2]{0}', space=sflag, size = 0x8, scoped, tag = 'scoped memory for silero_vad_forward.1']
    #allocation8 [shape = 'u8[98304]{0}', space=vmem, size = 0x18000, scoped, tag = 'input window, operand 15, single buffered']
    #allocation9 [shape = 's32[1]{0}', space=sflag, size = 0x4, scoped, tag = 'scoped memory for silero_vad_forward.1']
    #allocation10 [shape = 'u8[2048]{0}', space=vmem, size = 0x800, scoped, tag = 'output window, operand 1, single buffered']
    %32 = vsyncpa [#allocation6], 0
    %33 = vsyncpa [#allocation9], 0
    %34 = vsyncpa [#allocation7], 0
    loop: start=0, step=1, limit=10
    $region2: #{silero_vad_forward.1} parent=1 // loop_pre_header
      _
    $region3: #{silero_vad_forward.1} parent=1 // loop_header
      %s36 = sphi 0, %s40
      %p37 = scmp.ge.s32.totalorder %s36, 10
      %s46 = sphi 0, %s48
      %s49 = sphi 0, %s46
      %s50 = sphi 0, %s49
      %s66 = sphi 0, %s50
      %s70 = sphi 0, %s70
      %s72 = sphi 0, %s70
      %s73 = sphi 0, %s72
      %s87 = sphi 0, %s73
      %s91 = sphi 0, %s91
      %s93 = sphi 0, %s91
      %s94 = sphi 0, %s93
      %s108 = sphi 0, %s94
      %s112 = sphi 0, %s112
      %s114 = sphi 0, %s112
      %s115 = sphi 0, %s114
      %s129 = sphi 0, %s115
      %s133 = sphi 0, %s133
      %s135 = sphi 0, %s133
      %s136 = sphi 0, %s135
      %s150 = sphi 0, %s136
      %s154 = sphi 0, %s154
      %s156 = sphi 0, %s154
      %s157 = sphi 0, %s156
      %s171 = sphi 0, %s157
      %s175 = sphi 0, %s175
      %s177 = sphi 0, %s175
      %s178 = sphi 0, %s177
      %s192 = sphi 0, %s178
      %s196 = sphi 0, %s196
      %s198 = sphi 0, %s196
      %s199 = sphi 0, %s198
      %s213 = sphi 0, %s199
      %s217 = sphi 0, %s217
      %s219 = sphi 0, %s217
      %s220 = sphi 0, %s219
      %s234 = sphi 0, %s220
      %s238 = sphi 0, %s238
      %s240 = sphi 0, %s238
      %s241 = sphi 0, %s240
      %s255 = sphi 0, %s241
      %s259 = sphi 0, %s259
      %s261 = sphi 0, %s259
      %s262 = sphi 0, %s261
      %s276 = sphi 0, %s262
      %s280 = sphi 0, %s280
      %s282 = sphi 0, %s280
      %s283 = sphi 0, %s282
      %s297 = sphi 0, %s283
      %s301 = sphi 0, %s301
      %s303 = sphi 0, %s301
      %s304 = sphi 0, %s303
      %s318 = sphi 0, %s304
      %s322 = sphi 0, %s322
      %s324 = sphi 0, %s322
      %s325 = sphi 0, %s324
      %s339 = sphi 0, %s325
      %s343 = sphi 0, %s343
      %s345 = sphi 0, %s343
      %s346 = sphi 0, %s345
      %s360 = sphi 0, %s346
      %s364 = sphi 0, %s364
      %s366 = sphi 0, %s364
      %s367 = sphi 0, %s366
      %s381 = sphi 0, %s367
      %s385 = sphi 0, %s385
      %s387 = sphi 0, %s385
      %s388 = sphi 0, %s387
      %s402 = sphi 0, %s388
      %s406 = sphi 0, %s406
      %s408 = sphi 0, %s406
      %s409 = sphi 0, %s408
      %s423 = sphi 0, %s409
      %s427 = sphi 0, %s427
      %s429 = sphi 0, %s427
      %s430 = sphi 0, %s429
      %s444 = sphi 0, %s430
      %s448 = sphi 0, %s448
      %s450 = sphi 0, %s448
      %s451 = sphi 0, %s450
      %s465 = sphi 0, %s451
      %s469 = sphi 0, %s469
      %s471 = sphi 0, %s469
      %s472 = sphi 0, %s471
      %s486 = sphi 0, %s472
      %s490 = sphi 0, %s490
      %s492 = sphi 0, %s490
      %s493 = sphi 0, %s492
      %s507 = sphi 0, %s493
      %s511 = sphi 0, %s511
      %s513 = sphi 0, %s511
      %s514 = sphi 0, %s513
      %s528 = sphi 0, %s514
      %s534 = sphi 0, %s536
      %s537 = sphi 0, %s534
      %s538 = sphi 0, %s537
      %s554 = sphi 0, %s538
      %s558 = sphi 0, %s558
      %s560 = sphi 0, %s558
      %s561 = sphi 0, %s560
      %s575 = sphi 0, %s561
    $region4: #{silero_vad_forward.1} parent=1 // loop_header_branch
      %39 = sbr.rel (%p37) target = $region8
    $region5: #{silero_vad_forward.1} parent=1 // loop_body
      %s41 = ssub.s32 %s36, 1
      %s42 = ssub.s32 %s36, 2
      %s43 = sadd.s32 %s36, 1
      %s44 = ssub.s32 %s36, %s43
      %p45 = scmp.eq.s32.totalorder %s44, 0
      %s47 = sadd.s32 %s46, 1
      %s48 = scalar_select %p45, %s46, %s47
      %p51 = pneg %p45
      %p52 = scmp.eq.s32.totalorder %s36, 7
      %p53 = por %p51, %p52
      %p54 = scmp.ne.s32.totalorder %s46, %s49
      %p55 = scmp.eq.s32.totalorder %s36, 0
      %p56 = por %p54, %p55
      %p57 = scmp.ne.s32.totalorder %s46, %s49
      %p58 = scmp.eq.s32.totalorder %s41, 7
      %p59 = por %p57, %p58
      %p60 = scmp.ne.s32.totalorder %s49, %s50
      %p61 = scmp.eq.s32.totalorder %s41, 0
      %p62 = por %p60, %p61
      %p63 = scmp.ne.s32.totalorder %s49, %s50
      %p64 = scmp.eq.s32.totalorder %s42, 7
      %p65 = por %p63, %p64
      %p67 = scmp.ne.s32.totalorder %s50, %s66
      %p68 = scmp.eq.s32.totalorder %s42, 0
      %p69 = por %p67, %p68
      %s71 = sadd.s32 %s70, 1
      %p74 = scmp.eq.s32.totalorder %s36, 7
      %p75 = scmp.ne.s32.totalorder %s70, %s72
      %p76 = scmp.eq.s32.totalorder %s36, 0
      %p77 = por %p75, %p76
      %p78 = scmp.ne.s32.totalorder %s70, %s72
      %p79 = scmp.eq.s32.totalorder %s41, 7
      %p80 = por %p78, %p79
      %p81 = scmp.ne.s32.totalorder %s72, %s73
      %p82 = scmp.eq.s32.totalorder %s41, 0
      %p83 = por %p81, %p82
      %p84 = scmp.ne.s32.totalorder %s72, %s73
      %p85 = scmp.eq.s32.totalorder %s42, 7
      %p86 = por %p84, %p85
      %p88 = scmp.ne.s32.totalorder %s73, %s87
      %p89 = scmp.eq.s32.totalorder %s42, 0
      %p90 = por %p88, %p89
      %s92 = sadd.s32 %s91, 1
      %p95 = scmp.eq.s32.totalorder %s36, 7
      %p96 = scmp.ne.s32.totalorder %s91, %s93
      %p97 = scmp.eq.s32.totalorder %s36, 0
      %p98 = por %p96, %p97
      %p99 = scmp.ne.s32.totalorder %s91, %s93
      %p100 = scmp.eq.s32.totalorder %s41, 7
      %p101 = por %p99, %p100
      %p102 = scmp.ne.s32.totalorder %s93, %s94
      %p103 = scmp.eq.s32.totalorder %s41, 0
      %p104 = por %p102, %p103
      %p105 = scmp.ne.s32.totalorder %s93, %s94
      %p106 = scmp.eq.s32.totalorder %s42, 7
      %p107 = por %p105, %p106
      %p109 = scmp.ne.s32.totalorder %s94, %s108
      %p110 = scmp.eq.s32.totalorder %s42, 0
      %p111 = por %p109, %p110
      %s113 = sadd.s32 %s112, 1
      %p116 = scmp.eq.s32.totalorder %s36, 7
      %p117 = scmp.ne.s32.totalorder %s112, %s114
      %p118 = scmp.eq.s32.totalorder %s36, 0
      %p119 = por %p117, %p118
      %p120 = scmp.ne.s32.totalorder %s112, %s114
      %p121 = scmp.eq.s32.totalorder %s41, 7
      %p122 = por %p120, %p121
      %p123 = scmp.ne.s32.totalorder %s114, %s115
      %p124 = scmp.eq.s32.totalorder %s41, 0
      %p125 = por %p123, %p124
      %p126 = scmp.ne.s32.totalorder %s114, %s115
      %p127 = scmp.eq.s32.totalorder %s42, 7
      %p128 = por %p126, %p127
      %p130 = scmp.ne.s32.totalorder %s115, %s129
      %p131 = scmp.eq.s32.totalorder %s42, 0
      %p132 = por %p130, %p131
      %s134 = sadd.s32 %s133, 1
      %p137 = scmp.eq.s32.totalorder %s36, 7
      %p138 = scmp.ne.s32.totalorder %s133, %s135
      %p139 = scmp.eq.s32.totalorder %s36, 0
      %p140 = por %p138, %p139
      %p141 = scmp.ne.s32.totalorder %s133, %s135
      %p142 = scmp.eq.s32.totalorder %s41, 7
      %p143 = por %p141, %p142
      %p144 = scmp.ne.s32.totalorder %s135, %s136
      %p145 = scmp.eq.s32.totalorder %s41, 0
      %p146 = por %p144, %p145
      %p147 = scmp.ne.s32.totalorder %s135, %s136
      %p148 = scmp.eq.s32.totalorder %s42, 7
      %p149 = por %p147, %p148
      %p151 = scmp.ne.s32.totalorder %s136, %s150
      %p152 = scmp.eq.s32.totalorder %s42, 0
      %p153 = por %p151, %p152
      %s155 = sadd.s32 %s154, 1
      %p158 = scmp.eq.s32.totalorder %s36, 7
      %p159 = scmp.ne.s32.totalorder %s154, %s156
      %p160 = scmp.eq.s32.totalorder %s36, 0
      %p161 = por %p159, %p160
      %p162 = scmp.ne.s32.totalorder %s154, %s156
      %p163 = scmp.eq.s32.totalorder %s41, 7
      %p164 = por %p162, %p163
      %p165 = scmp.ne.s32.totalorder %s156, %s157
      %p166 = scmp.eq.s32.totalorder %s41, 0
      %p167 = por %p165, %p166
      %p168 = scmp.ne.s32.totalorder %s156, %s157
      %p169 = scmp.eq.s32.totalorder %s42, 7
      %p170 = por %p168, %p169
      %p172 = scmp.ne.s32.totalorder %s157, %s171
      %p173 = scmp.eq.s32.totalorder %s42, 0
      %p174 = por %p172, %p173
      %s176 = sadd.s32 %s175, 1
      %p179 = scmp.eq.s32.totalorder %s36, 7
      %p180 = scmp.ne.s32.totalorder %s175, %s177
      %p181 = scmp.eq.s32.totalorder %s36, 0
      %p182 = por %p180, %p181
      %p183 = scmp.ne.s32.totalorder %s175, %s177
      %p184 = scmp.eq.s32.totalorder %s41, 7
      %p185 = por %p183, %p184
      %p186 = scmp.ne.s32.totalorder %s177, %s178
      %p187 = scmp.eq.s32.totalorder %s41, 0
      %p188 = por %p186, %p187
      %p189 = scmp.ne.s32.totalorder %s177, %s178
      %p190 = scmp.eq.s32.totalorder %s42, 7
      %p191 = por %p189, %p190
      %p193 = scmp.ne.s32.totalorder %s178, %s192
      %p194 = scmp.eq.s32.totalorder %s42, 0
      %p195 = por %p193, %p194
      %s197 = sadd.s32 %s196, 1
      %p200 = scmp.eq.s32.totalorder %s36, 7
      %p201 = scmp.ne.s32.totalorder %s196, %s198
      %p202 = scmp.eq.s32.totalorder %s36, 0
      %p203 = por %p201, %p202
      %p204 = scmp.ne.s32.totalorder %s196, %s198
      %p205 = scmp.eq.s32.totalorder %s41, 7
      %p206 = por %p204, %p205
      %p207 = scmp.ne.s32.totalorder %s198, %s199
      %p208 = scmp.eq.s32.totalorder %s41, 0
      %p209 = por %p207, %p208
      %p210 = scmp.ne.s32.totalorder %s198, %s199
      %p211 = scmp.eq.s32.totalorder %s42, 7
      %p212 = por %p210, %p211
      %p214 = scmp.ne.s32.totalorder %s199, %s213
      %p215 = scmp.eq.s32.totalorder %s42, 0
      %p216 = por %p214, %p215
      %s218 = sadd.s32 %s217, 1
      %p221 = scmp.eq.s32.totalorder %s36, 7
      %p222 = scmp.ne.s32.totalorder %s217, %s219
      %p223 = scmp.eq.s32.totalorder %s36, 0
      %p224 = por %p222, %p223
      %p225 = scmp.ne.s32.totalorder %s217, %s219
      %p226 = scmp.eq.s32.totalorder %s41, 7
      %p227 = por %p225, %p226
      %p228 = scmp.ne.s32.totalorder %s219, %s220
      %p229 = scmp.eq.s32.totalorder %s41, 0
      %p230 = por %p228, %p229
      %p231 = scmp.ne.s32.totalorder %s219, %s220
      %p232 = scmp.eq.s32.totalorder %s42, 7
      %p233 = por %p231, %p232
      %p235 = scmp.ne.s32.totalorder %s220, %s234
      %p236 = scmp.eq.s32.totalorder %s42, 0
      %p237 = por %p235, %p236
      %s239 = sadd.s32 %s238, 1
      %p242 = scmp.eq.s32.totalorder %s36, 7
      %p243 = scmp.ne.s32.totalorder %s238, %s240
      %p244 = scmp.eq.s32.totalorder %s36, 0
      %p245 = por %p243, %p244
      %p246 = scmp.ne.s32.totalorder %s238, %s240
      %p247 = scmp.eq.s32.totalorder %s41, 7
      %p248 = por %p246, %p247
      %p249 = scmp.ne.s32.totalorder %s240, %s241
      %p250 = scmp.eq.s32.totalorder %s41, 0
      %p251 = por %p249, %p250
      %p252 = scmp.ne.s32.totalorder %s240, %s241
      %p253 = scmp.eq.s32.totalorder %s42, 7
      %p254 = por %p252, %p253
      %p256 = scmp.ne.s32.totalorder %s241, %s255
      %p257 = scmp.eq.s32.totalorder %s42, 0
      %p258 = por %p256, %p257
      %s260 = sadd.s32 %s259, 1
      %p263 = scmp.eq.s32.totalorder %s36, 7
      %p264 = scmp.ne.s32.totalorder %s259, %s261
      %p265 = scmp.eq.s32.totalorder %s36, 0
      %p266 = por %p264, %p265
      %p267 = scmp.ne.s32.totalorder %s259, %s261
      %p268 = scmp.eq.s32.totalorder %s41, 7
      %p269 = por %p267, %p268
      %p270 = scmp.ne.s32.totalorder %s261, %s262
      %p271 = scmp.eq.s32.totalorder %s41, 0
      %p272 = por %p270, %p271
      %p273 = scmp.ne.s32.totalorder %s261, %s262
      %p274 = scmp.eq.s32.totalorder %s42, 7
      %p275 = por %p273, %p274
      %p277 = scmp.ne.s32.totalorder %s262, %s276
      %p278 = scmp.eq.s32.totalorder %s42, 0
      %p279 = por %p277, %p278
      %s281 = sadd.s32 %s280, 1
      %p284 = scmp.eq.s32.totalorder %s36, 7
      %p285 = scmp.ne.s32.totalorder %s280, %s282
      %p286 = scmp.eq.s32.totalorder %s36, 0
      %p287 = por %p285, %p286
      %p288 = scmp.ne.s32.totalorder %s280, %s282
      %p289 = scmp.eq.s32.totalorder %s41, 7
      %p290 = por %p288, %p289
      %p291 = scmp.ne.s32.totalorder %s282, %s283
      %p292 = scmp.eq.s32.totalorder %s41, 0
      %p293 = por %p291, %p292
      %p294 = scmp.ne.s32.totalorder %s282, %s283
      %p295 = scmp.eq.s32.totalorder %s42, 7
      %p296 = por %p294, %p295
      %p298 = scmp.ne.s32.totalorder %s283, %s297
      %p299 = scmp.eq.s32.totalorder %s42, 0
      %p300 = por %p298, %p299
      %s302 = sadd.s32 %s301, 1
      %p305 = scmp.eq.s32.totalorder %s36, 7
      %p306 = scmp.ne.s32.totalorder %s301, %s303
      %p307 = scmp.eq.s32.totalorder %s36, 0
      %p308 = por %p306, %p307
      %p309 = scmp.ne.s32.totalorder %s301, %s303
      %p310 = scmp.eq.s32.totalorder %s41, 7
      %p311 = por %p309, %p310
      %p312 = scmp.ne.s32.totalorder %s303, %s304
      %p313 = scmp.eq.s32.totalorder %s41, 0
      %p314 = por %p312, %p313
      %p315 = scmp.ne.s32.totalorder %s303, %s304
      %p316 = scmp.eq.s32.totalorder %s42, 7
      %p317 = por %p315, %p316
      %p319 = scmp.ne.s32.totalorder %s304, %s318
      %p320 = scmp.eq.s32.totalorder %s42, 0
      %p321 = por %p319, %p320
      %s323 = sadd.s32 %s322, 1
      %p326 = scmp.eq.s32.totalorder %s36, 7
      %p327 = scmp.ne.s32.totalorder %s322, %s324
      %p328 = scmp.eq.s32.totalorder %s36, 0
      %p329 = por %p327, %p328
      %p330 = scmp.ne.s32.totalorder %s322, %s324
      %p331 = scmp.eq.s32.totalorder %s41, 7
      %p332 = por %p330, %p331
      %p333 = scmp.ne.s32.totalorder %s324, %s325
      %p334 = scmp.eq.s32.totalorder %s41, 0
      %p335 = por %p333, %p334
      %p336 = scmp.ne.s32.totalorder %s324, %s325
      %p337 = scmp.eq.s32.totalorder %s42, 7
      %p338 = por %p336, %p337
      %p340 = scmp.ne.s32.totalorder %s325, %s339
      %p341 = scmp.eq.s32.totalorder %s42, 0
      %p342 = por %p340, %p341
      %s344 = sadd.s32 %s343, 1
      %p347 = scmp.eq.s32.totalorder %s36, 7
      %p348 = scmp.ne.s32.totalorder %s343, %s345
      %p349 = scmp.eq.s32.totalorder %s36, 0
      %p350 = por %p348, %p349
      %p351 = scmp.ne.s32.totalorder %s343, %s345
      %p352 = scmp.eq.s32.totalorder %s41, 7
      %p353 = por %p351, %p352
      %p354 = scmp.ne.s32.totalorder %s345, %s346
      %p355 = scmp.eq.s32.totalorder %s41, 0
      %p356 = por %p354, %p355
      %p357 = scmp.ne.s32.totalorder %s345, %s346
      %p358 = scmp.eq.s32.totalorder %s42, 7
      %p359 = por %p357, %p358
      %p361 = scmp.ne.s32.totalorder %s346, %s360
      %p362 = scmp.eq.s32.totalorder %s42, 0
      %p363 = por %p361, %p362
      %s365 = sadd.s32 %s364, 1
      %p368 = scmp.eq.s32.totalorder %s36, 7
      %p369 = scmp.ne.s32.totalorder %s364, %s366
      %p370 = scmp.eq.s32.totalorder %s36, 0
      %p371 = por %p369, %p370
      %p372 = scmp.ne.s32.totalorder %s364, %s366
      %p373 = scmp.eq.s32.totalorder %s41, 7
      %p374 = por %p372, %p373
      %p375 = scmp.ne.s32.totalorder %s366, %s367
      %p376 = scmp.eq.s32.totalorder %s41, 0
      %p377 = por %p375, %p376
      %p378 = scmp.ne.s32.totalorder %s366, %s367
      %p379 = scmp.eq.s32.totalorder %s42, 7
      %p380 = por %p378, %p379
      %p382 = scmp.ne.s32.totalorder %s367, %s381
      %p383 = scmp.eq.s32.totalorder %s42, 0
      %p384 = por %p382, %p383
      %s386 = sadd.s32 %s385, 1
      %p389 = scmp.eq.s32.totalorder %s36, 7
      %p390 = scmp.ne.s32.totalorder %s385, %s387
      %p391 = scmp.eq.s32.totalorder %s36, 0
      %p392 = por %p390, %p391
      %p393 = scmp.ne.s32.totalorder %s385, %s387
      %p394 = scmp.eq.s32.totalorder %s41, 7
      %p395 = por %p393, %p394
      %p396 = scmp.ne.s32.totalorder %s387, %s388
      %p397 = scmp.eq.s32.totalorder %s41, 0
      %p398 = por %p396, %p397
      %p399 = scmp.ne.s32.totalorder %s387, %s388
      %p400 = scmp.eq.s32.totalorder %s42, 7
      %p401 = por %p399, %p400
      %p403 = scmp.ne.s32.totalorder %s388, %s402
      %p404 = scmp.eq.s32.totalorder %s42, 0
      %p405 = por %p403, %p404
      %s407 = sadd.s32 %s406, 1
      %p410 = scmp.eq.s32.totalorder %s36, 7
      %p411 = scmp.ne.s32.totalorder %s406, %s408
      %p412 = scmp.eq.s32.totalorder %s36, 0
      %p413 = por %p411, %p412
      %p414 = scmp.ne.s32.totalorder %s406, %s408
      %p415 = scmp.eq.s32.totalorder %s41, 7
      %p416 = por %p414, %p415
      %p417 = scmp.ne.s32.totalorder %s408, %s409
      %p418 = scmp.eq.s32.totalorder %s41, 0
      %p419 = por %p417, %p418
      %p420 = scmp.ne.s32.totalorder %s408, %s409
      %p421 = scmp.eq.s32.totalorder %s42, 7
      %p422 = por %p420, %p421
      %p424 = scmp.ne.s32.totalorder %s409, %s423
      %p425 = scmp.eq.s32.totalorder %s42, 0
      %p426 = por %p424, %p425
      %s428 = sadd.s32 %s427, 1
      %p431 = scmp.eq.s32.totalorder %s36, 7
      %p432 = scmp.ne.s32.totalorder %s427, %s429
      %p433 = scmp.eq.s32.totalorder %s36, 0
      %p434 = por %p432, %p433
      %p435 = scmp.ne.s32.totalorder %s427, %s429
      %p436 = scmp.eq.s32.totalorder %s41, 7
      %p437 = por %p435, %p436
      %p438 = scmp.ne.s32.totalorder %s429, %s430
      %p439 = scmp.eq.s32.totalorder %s41, 0
      %p440 = por %p438, %p439
      %p441 = scmp.ne.s32.totalorder %s429, %s430
      %p442 = scmp.eq.s32.totalorder %s42, 7
      %p443 = por %p441, %p442
      %p445 = scmp.ne.s32.totalorder %s430, %s444
      %p446 = scmp.eq.s32.totalorder %s42, 0
      %p447 = por %p445, %p446
      %s449 = sadd.s32 %s448, 1
      %p452 = scmp.eq.s32.totalorder %s36, 7
      %p453 = scmp.ne.s32.totalorder %s448, %s450
      %p454 = scmp.eq.s32.totalorder %s36, 0
      %p455 = por %p453, %p454
      %p456 = scmp.ne.s32.totalorder %s448, %s450
      %p457 = scmp.eq.s32.totalorder %s41, 7
      %p458 = por %p456, %p457
      %p459 = scmp.ne.s32.totalorder %s450, %s451
      %p460 = scmp.eq.s32.totalorder %s41, 0
      %p461 = por %p459, %p460
      %p462 = scmp.ne.s32.totalorder %s450, %s451
      %p463 = scmp.eq.s32.totalorder %s42, 7
      %p464 = por %p462, %p463
      %p466 = scmp.ne.s32.totalorder %s451, %s465
      %p467 = scmp.eq.s32.totalorder %s42, 0
      %p468 = por %p466, %p467
      %s470 = sadd.s32 %s469, 1
      %p473 = scmp.eq.s32.totalorder %s36, 7
      %p474 = scmp.ne.s32.totalorder %s469, %s471
      %p475 = scmp.eq.s32.totalorder %s36, 0
      %p476 = por %p474, %p475
      %p477 = scmp.ne.s32.totalorder %s469, %s471
      %p478 = scmp.eq.s32.totalorder %s41, 7
      %p479 = por %p477, %p478
      %p480 = scmp.ne.s32.totalorder %s471, %s472
      %p481 = scmp.eq.s32.totalorder %s41, 0
      %p482 = por %p480, %p481
      %p483 = scmp.ne.s32.totalorder %s471, %s472
      %p484 = scmp.eq.s32.totalorder %s42, 7
      %p485 = por %p483, %p484
      %p487 = scmp.ne.s32.totalorder %s472, %s486
      %p488 = scmp.eq.s32.totalorder %s42, 0
      %p489 = por %p487, %p488
      %s491 = sadd.s32 %s490, 1
      %p494 = scmp.eq.s32.totalorder %s36, 7
      %p495 = scmp.ne.s32.totalorder %s490, %s492
      %p496 = scmp.eq.s32.totalorder %s36, 0
      %p497 = por %p495, %p496
      %p498 = scmp.ne.s32.totalorder %s490, %s492
      %p499 = scmp.eq.s32.totalorder %s41, 7
      %p500 = por %p498, %p499
      %p501 = scmp.ne.s32.totalorder %s492, %s493
      %p502 = scmp.eq.s32.totalorder %s41, 0
      %p503 = por %p501, %p502
      %p504 = scmp.ne.s32.totalorder %s492, %s493
      %p505 = scmp.eq.s32.totalorder %s42, 7
      %p506 = por %p504, %p505
      %p508 = scmp.ne.s32.totalorder %s493, %s507
      %p509 = scmp.eq.s32.totalorder %s42, 0
      %p510 = por %p508, %p509
      %s512 = sadd.s32 %s511, 1
      %p515 = scmp.eq.s32.totalorder %s36, 7
      %p516 = scmp.ne.s32.totalorder %s511, %s513
      %p517 = scmp.eq.s32.totalorder %s36, 0
      %p518 = por %p516, %p517
      %p519 = scmp.ne.s32.totalorder %s511, %s513
      %p520 = scmp.eq.s32.totalorder %s41, 7
      %p521 = por %p519, %p520
      %p522 = scmp.ne.s32.totalorder %s513, %s514
      %p523 = scmp.eq.s32.totalorder %s41, 0
      %p524 = por %p522, %p523
      %p525 = scmp.ne.s32.totalorder %s513, %s514
      %p526 = scmp.eq.s32.totalorder %s42, 7
      %p527 = por %p525, %p526
      %p529 = scmp.ne.s32.totalorder %s514, %s528
      %p530 = scmp.eq.s32.totalorder %s42, 0
      %p531 = por %p529, %p530
      %s532 = ssub.s32 %s36, %s43
      %p533 = scmp.eq.s32.totalorder %s532, 0
      %s535 = sadd.s32 %s534, 1
      %s536 = scalar_select %p533, %s534, %s535
      %p539 = pneg %p533
      %p540 = scmp.eq.s32.totalorder %s36, 7
      %p541 = por %p539, %p540
      %p542 = scmp.ne.s32.totalorder %s534, %s537
      %p543 = scmp.eq.s32.totalorder %s36, 0
      %p544 = por %p542, %p543
      %p545 = scmp.ne.s32.totalorder %s534, %s537
      %p546 = scmp.eq.s32.totalorder %s41, 7
      %p547 = por %p545, %p546
      %p548 = scmp.ne.s32.totalorder %s537, %s538
      %p549 = scmp.eq.s32.totalorder %s41, 0
      %p550 = por %p548, %p549
      %p551 = scmp.ne.s32.totalorder %s537, %s538
      %p552 = scmp.eq.s32.totalorder %s42, 7
      %p553 = por %p551, %p552
      %p555 = scmp.ne.s32.totalorder %s538, %s554
      %p556 = scmp.eq.s32.totalorder %s42, 0
      %p557 = por %p555, %p556
      %s559 = sadd.s32 %s558, 1
      %p562 = scmp.eq.s32.totalorder %s36, 7
      %p563 = scmp.ne.s32.totalorder %s558, %s560
      %p564 = scmp.eq.s32.totalorder %s36, 0
      %p565 = por %p563, %p564
      %p566 = scmp.ne.s32.totalorder %s558, %s560
      %p567 = scmp.eq.s32.totalorder %s41, 7
      %p568 = por %p566, %p567
      %p569 = scmp.ne.s32.totalorder %s560, %s561
      %p570 = scmp.eq.s32.totalorder %s41, 0
      %p571 = por %p569, %p570
      %p572 = scmp.ne.s32.totalorder %s560, %s561
      %p573 = scmp.eq.s32.totalorder %s42, 7
      %p574 = por %p572, %p573
      %p576 = scmp.ne.s32.totalorder %s561, %s575
      %p577 = scmp.eq.s32.totalorder %s42, 0
      %p578 = por %p576, %p577
      %p579 = scmp.le.s32.totalorder 1, %s36
      %p580 = scmp.lt.s32.totalorder %s36, 9
      %p581 = pnand %p579, %p580
      %p582 = pneg %p581
      // Predicated region
      $region9: #{silero_vad_forward.1} parent=5 // pred_check
        _
      $region10: #{silero_vad_forward.1} parent=5 // pred_check_branch
        %584 = sbr.rel (%p581) target = $region12
      $region11: #{silero_vad_forward.1} parent=5 // pred_region
        %s585 = ssub.s32 %s36, 1
        // Predicated region
        $region13: #{silero_vad_forward.1} parent=11 // pred_check
          %p586 = pneg %p83
        $region14: #{silero_vad_forward.1} parent=11 // pred_check_branch
          %588 = sbr.rel (%p586) target = $region16
        $region15: #{silero_vad_forward.1} parent=11 // pred_region
          _
        $region16: #{silero_vad_forward.1} parent=11 // pred_fallthru
          _
        // Predicated region
        $region17: #{silero_vad_forward.1} parent=11 // pred_check
          %p589 = pneg %p104
        $region18: #{silero_vad_forward.1} parent=11 // pred_check_branch
          %591 = sbr.rel (%p589) target = $region20
        $region19: #{silero_vad_forward.1} parent=11 // pred_region
          %s593 = ssub.s32 4096, 4096
          %594 = vsyncadd [#allocation6], %s593
          %s595 = sshll.u32 [#allocation5], 4
          %s596 = int_to_ptr.vmem [resolvable:$true] %s595
          %601 = dma.hbm_to_vmem [thread:$0]  %s2, 4096, %s596, [#allocation6], 256, 256, 16
        $region20: #{silero_vad_forward.1} parent=11 // pred_fallthru
          _
        // Predicated region
        $region21: #{silero_vad_forward.1} parent=11 // pred_check
          %p602 = pneg %p125
        $region22: #{silero_vad_forward.1} parent=11 // pred_check_branch
          %604 = sbr.rel (%p602) target = $region24
        $region23: #{silero_vad_forward.1} parent=11 // pred_region
          _
        $region24: #{silero_vad_forward.1} parent=11 // pred_fallthru
          _
        // Predicated region
        $region25: #{silero_vad_forward.1} parent=11 // pred_check
          %p605 = pneg %p146
        $region26: #{silero_vad_forward.1} parent=11 // pred_check_branch
          %607 = sbr.rel (%p605) target = $region28
        $region27: #{silero_vad_forward.1} parent=11 // pred_region
          _
        $region28: #{silero_vad_forward.1} parent=11 // pred_fallthru
          _
        // Predicated region
        $region29: #{silero_vad_forward.1} parent=11 // pred_check
          %p608 = pneg %p167
        $region30: #{silero_vad_forward.1} parent=11 // pred_check_branch
          %610 = sbr.rel (%p608) target = $region32
        $region31: #{silero_vad_forward.1} parent=11 // pred_region
          _
        $region32: #{silero_vad_forward.1} parent=11 // pred_fallthru
          _
        // Predicated region
        $region33: #{silero_vad_forward.1} parent=11 // pred_check
          %p611 = pneg %p188
        $region34: #{silero_vad_forward.1} parent=11 // pred_check_branch
          %613 = sbr.rel (%p611) target = $region36
        $region35: #{silero_vad_forward.1} parent=11 // pred_region
          _
        $region36: #{silero_vad_forward.1} parent=11 // pred_fallthru
          _
        // Predicated region
        $region37: #{silero_vad_forward.1} parent=11 // pred_check
          %p614 = pneg %p209
        $region38: #{silero_vad_forward.1} parent=11 // pred_check_branch
          %616 = sbr.rel (%p614) target = $region40
        $region39: #{silero_vad_forward.1} parent=11 // pred_region
          _
        $region40: #{silero_vad_forward.1} parent=11 // pred_fallthru
          _
        // Predicated region
        $region41: #{silero_vad_forward.1} parent=11 // pred_check
          %p617 = pneg %p230
        $region42: #{silero_vad_forward.1} parent=11 // pred_check_branch
          %619 = sbr.rel (%p617) target = $region44
        $region43: #{silero_vad_forward.1} parent=11 // pred_region
          _
        $region44: #{silero_vad_forward.1} parent=11 // pred_fallthru
          _
        // Predicated region
        $region45: #{silero_vad_forward.1} parent=11 // pred_check
          %p620 = pneg %p251
        $region46: #{silero_vad_forward.1} parent=11 // pred_check_branch
          %622 = sbr.rel (%p620) target = $region48
        $region47: #{silero_vad_forward.1} parent=11 // pred_region
          _
        $region48: #{silero_vad_forward.1} parent=11 // pred_fallthru
          _
        // Predicated region
        $region49: #{silero_vad_forward.1} parent=11 // pred_check
          %p623 = pneg %p272
        $region50: #{silero_vad_forward.1} parent=11 // pred_check_branch
          %625 = sbr.rel (%p623) target = $region52
        $region51: #{silero_vad_forward.1} parent=11 // pred_region
          _
        $region52: #{silero_vad_forward.1} parent=11 // pred_fallthru
          _
        // Predicated region
        $region53: #{silero_vad_forward.1} parent=11 // pred_check
          %p626 = pneg %p293
        $region54: #{silero_vad_forward.1} parent=11 // pred_check_branch
          %628 = sbr.rel (%p626) target = $region56
        $region55: #{silero_vad_forward.1} parent=11 // pred_region
          _
        $region56: #{silero_vad_forward.1} parent=11 // pred_fallthru
          _
        // Predicated region
        $region57: #{silero_vad_forward.1} parent=11 // pred_check
          %p629 = pneg %p314
        $region58: #{silero_vad_forward.1} parent=11 // pred_check_branch
          %631 = sbr.rel (%p629) target = $region60
        $region59: #{silero_vad_forward.1} parent=11 // pred_region
          _
        $region60: #{silero_vad_forward.1} parent=11 // pred_fallthru
          _
        // Predicated region
        $region61: #{silero_vad_forward.1} parent=11 // pred_check
          %p632 = pneg %p335
        $region62: #{silero_vad_forward.1} parent=11 // pred_check_branch
          %634 = sbr.rel (%p632) target = $region64
        $region63: #{silero_vad_forward.1} parent=11 // pred_region
          _
        $region64: #{silero_vad_forward.1} parent=11 // pred_fallthru
          _
        // Predicated region
        $region65: #{silero_vad_forward.1} parent=11 // pred_check
          %p635 = pneg %p356
        $region66: #{silero_vad_forward.1} parent=11 // pred_check_branch
          %637 = sbr.rel (%p635) target = $region68
        $region67: #{silero_vad_forward.1} parent=11 // pred_region
          _
        $region68: #{silero_vad_forward.1} parent=11 // pred_fallthru
          _
        // Predicated region
        $region69: #{silero_vad_forward.1} parent=11 // pred_check
          %p638 = pneg %p377
        $region70: #{silero_vad_forward.1} parent=11 // pred_check_branch
          %640 = sbr.rel (%p638) target = $region72
        $region71: #{silero_vad_forward.1} parent=11 // pred_region
          %s642 = ssub.s32 3072, 3072
          %643 = vsyncadd [#allocation9], %s642
          %s644 = sshll.u32 [#allocation8], 4
          %s645 = int_to_ptr.vmem [resolvable:$true] %s644
          %650 = dma.hbm_to_vmem [thread:$0]  %s15, 3072, %s645, [#allocation9], 128, 128, 8
        $region72: #{silero_vad_forward.1} parent=11 // pred_fallthru
          _
        // Predicated region
        $region73: #{silero_vad_forward.1} parent=11 // pred_check
          %p651 = pneg %p398
        $region74: #{silero_vad_forward.1} parent=11 // pred_check_branch
          %653 = sbr.rel (%p651) target = $region76
        $region75: #{silero_vad_forward.1} parent=11 // pred_region
          _
        $region76: #{silero_vad_forward.1} parent=11 // pred_fallthru
          _
        // Predicated region
        $region77: #{silero_vad_forward.1} parent=11 // pred_check
          %p654 = pneg %p419
        $region78: #{silero_vad_forward.1} parent=11 // pred_check_branch
          %656 = sbr.rel (%p654) target = $region80
        $region79: #{silero_vad_forward.1} parent=11 // pred_region
          _
        $region80: #{silero_vad_forward.1} parent=11 // pred_fallthru
          _
        // Predicated region
        $region81: #{silero_vad_forward.1} parent=11 // pred_check
          %p657 = pneg %p440
        $region82: #{silero_vad_forward.1} parent=11 // pred_check_branch
          %659 = sbr.rel (%p657) target = $region84
        $region83: #{silero_vad_forward.1} parent=11 // pred_region
          _
        $region84: #{silero_vad_forward.1} parent=11 // pred_fallthru
          _
        // Predicated region
        $region85: #{silero_vad_forward.1} parent=11 // pred_check
          %p660 = pneg %p461
        $region86: #{silero_vad_forward.1} parent=11 // pred_check_branch
          %662 = sbr.rel (%p660) target = $region88
        $region87: #{silero_vad_forward.1} parent=11 // pred_region
          _
        $region88: #{silero_vad_forward.1} parent=11 // pred_fallthru
          _
        // Predicated region
        $region89: #{silero_vad_forward.1} parent=11 // pred_check
          %p663 = pneg %p482
        $region90: #{silero_vad_forward.1} parent=11 // pred_check_branch
          %665 = sbr.rel (%p663) target = $region92
        $region91: #{silero_vad_forward.1} parent=11 // pred_region
          _
        $region92: #{silero_vad_forward.1} parent=11 // pred_fallthru
          _
        // Predicated region
        $region93: #{silero_vad_forward.1} parent=11 // pred_check
          %p666 = pneg %p503
        $region94: #{silero_vad_forward.1} parent=11 // pred_check_branch
          %668 = sbr.rel (%p666) target = $region96
        $region95: #{silero_vad_forward.1} parent=11 // pred_region
          _
        $region96: #{silero_vad_forward.1} parent=11 // pred_fallthru
          _
        // Predicated region
        $region97: #{silero_vad_forward.1} parent=11 // pred_check
          %p669 = pneg %p524
        $region98: #{silero_vad_forward.1} parent=11 // pred_check_branch
          %671 = sbr.rel (%p669) target = $region100
        $region99: #{silero_vad_forward.1} parent=11 // pred_region
          _
        $region100: #{silero_vad_forward.1} parent=11 // pred_fallthru
          _
      $region12: #{silero_vad_forward.1} parent=5 // pred_fallthru
        _
      %p672 = scmp.lt.s32.totalorder %s36, 8
      // Predicated region
      $region101: #{silero_vad_forward.1} parent=5 // pred_check
        %p673 = pneg %p672
      $region102: #{silero_vad_forward.1} parent=5 // pred_check_branch
        %675 = sbr.rel (%p673) target = $region104
      $region103: #{silero_vad_forward.1} parent=5 // pred_region
        // Predicated region
        $region105: #{silero_vad_forward.1} parent=103 // pred_check
          %p676 = pneg %p56
        $region106: #{silero_vad_forward.1} parent=103 // pred_check_branch
          %678 = sbr.rel (%p676) target = $region108
        $region107: #{silero_vad_forward.1} parent=103 // pred_region
          %p679 = scmp.lt.s32.totalorder %s36, 7
          %s680 = scalar_select %p679, %s36, 7
          %s681 = smul.addr %s680, 8
          %s682 = scalar_lea.vmem %s0, %s681
        $region108: #{silero_vad_forward.1} parent=103 // pred_fallthru
          _
      $region104: #{silero_vad_forward.1} parent=5 // pred_fallthru
        _
      %p683 = scmp.le.s32.totalorder 1, %s36
      %p684 = scmp.lt.s32.totalorder %s36, 9
      %p685 = pnand %p683, %p684
      %p686 = pneg %p685
      // Predicated region
      $region109: #{silero_vad_forward.1} parent=5 // pred_check
        _
      $region110: #{silero_vad_forward.1} parent=5 // pred_check_branch
        %688 = sbr.rel (%p685) target = $region112
      $region111: #{silero_vad_forward.1} parent=5 // pred_region
        %s689 = ssub.s32 %s36, 1
        // Predicated region
        $region113: #{silero_vad_forward.1} parent=111 // pred_check
          %p690 = pneg %p104
        $region114: #{silero_vad_forward.1} parent=111 // pred_check_branch
          %692 = sbr.rel (%p690) target = $region116
        $region115: #{silero_vad_forward.1} parent=111 // pred_region
          %693 = dma.done [#allocation6], 4096
        $region116: #{silero_vad_forward.1} parent=111 // pred_fallthru
          _
        // Predicated region
        $region117: #{silero_vad_forward.1} parent=111 // pred_check
          %p694 = pneg %p377
        $region118: #{silero_vad_forward.1} parent=111 // pred_check_branch
          %696 = sbr.rel (%p694) target = $region120
        $region119: #{silero_vad_forward.1} parent=111 // pred_region
          %697 = dma.done [#allocation9], 3072
        $region120: #{silero_vad_forward.1} parent=111 // pred_fallthru
          _
        %p698 = scmp.lt.s32.totalorder %s41, 7
        %s699 = scalar_select %p698, %s41, 7
        %s700 = smul.addr %s699, 8
        %s701 = scalar_lea.vmem %s0, %s700
        %p702 = pneg %p62
        %p703 = pneg %p59
        %p704 = pneg %p83
        %p705 = pneg %p80
        %p706 = pneg %p104
        %p707 = pneg %p101
        %p708 = pneg %p125
        %p709 = pneg %p122
        %p710 = pneg %p146
        %p711 = pneg %p143
        %p712 = pneg %p167
        %p713 = pneg %p164
        %p714 = pneg %p188
        %p715 = pneg %p185
        %p716 = pneg %p209
        %p717 = pneg %p206
        %p718 = pneg %p230
        %p719 = pneg %p227
        %p720 = pneg %p251
        %p721 = pneg %p248
        %p722 = pneg %p272
        %p723 = pneg %p269
        %p724 = pneg %p293
        %p725 = pneg %p290
        %p726 = pneg %p314
        %p727 = pneg %p311
        %p728 = pneg %p335
        %p729 = pneg %p332
        %p730 = pneg %p356
        %p731 = pneg %p353
        %p732 = pneg %p377
        %p733 = pneg %p374
        %p734 = pneg %p398
        %p735 = pneg %p395
        %p736 = pneg %p419
        %p737 = pneg %p416
        %p738 = pneg %p440
        %p739 = pneg %p437
        %p740 = pneg %p461
        %p741 = pneg %p458
        %p742 = pneg %p482
        %p743 = pneg %p479
        %p744 = pneg %p503
        %p745 = pneg %p500
        %p746 = pneg %p524
        %p747 = pneg %p521
        %p748 = pneg %p550
        %p749 = pneg %p547
        %p750 = scmp.lt.s32.totalorder %s41, 7
        %s751 = scalar_select %p750, %s41, 7
        %s752 = smul.addr %s751, 2
        %s753 = scalar_lea.vmem %s23, %s752
        %p754 = pneg %p571
        %p755 = pneg %p568
        %p756 = scmp.lt.s32.totalorder %s41, 7
        %s757 = scalar_select %p756, %s41, 7
        %s758 = smul.addr %s757, 8
        %s759 = scalar_lea.vmem %s0, %s758
        %p760 = scmp.lt.s32.totalorder %s41, 7
        %s761 = scalar_select %p760, %s41, 7
        %s762 = smul.addr %s761, 2
        %s763 = scalar_lea.vmem %s23, %s762
        %p764 = scmp.eq.s32.totalorder %s41, 0
        // Predicated region
        $region121: #{silero_vad_forward.1} parent=111 // pred_check
          %p765 = pneg %p764
        $region122: #{silero_vad_forward.1} parent=111 // pred_check_branch
          %767 = sbr.rel (%p765) target = $region124
        $region123: #{silero_vad_forward.1} parent=111 // pred_region
          %v768 = vld [vmem:[%s1] sm:$0x3]
          %769 = vst [vmem:[#allocation2] sm:$0x3] %v768
          %s770 = scalar_lea.vmem %s1, 2
          %v771 = vld [vmem:[%s770] sm:$0x3]
          %772 = vst [vmem:[#allocation3] sm:$0x3] %v771
        $region124: #{silero_vad_forward.1} parent=111 // pred_fallthru
          _
        %v773 = vld [vmem:[%s759] sm:$0xff]
        %v774 = vld [vmem:[#allocation5] sm:$0xff]
        %v775 = vld [vmem:[#allocation5 + $0x8] sm:$0xff]
        %v776 = vld [vmem:[#allocation5 + $0x10] sm:$0xff]
        %v777 = vld [vmem:[#allocation5 + $0x18] sm:$0xff]
        %v778 = vld [vmem:[#allocation5 + $0x20] sm:$0xff]
        %v779 = vld [vmem:[#allocation5 + $0x28] sm:$0xff]
        %v780 = vld [vmem:[#allocation5 + $0x30] sm:$0xff]
        %v781 = vld [vmem:[#allocation5 + $0x38] sm:$0xff]
        %v782 = vld [vmem:[#allocation5 + $0x40] sm:$0xff]
        %v783 = vld [vmem:[#allocation5 + $0x48] sm:$0xff]
        %v784 = vld [vmem:[#allocation5 + $0x50] sm:$0xff]
        %v785 = vld [vmem:[#allocation5 + $0x58] sm:$0xff]
        %v786 = vld [vmem:[#allocation5 + $0x60] sm:$0xff]
        %v787 = vld [vmem:[#allocation5 + $0x68] sm:$0xff]
        %v788 = vld [vmem:[#allocation5 + $0x70] sm:$0xff]
        %v789 = vld [vmem:[#allocation5 + $0x78] sm:$0xff]
        %v790 = vld [vmem:[#allocation5 + $0x80] sm:$0xff]
        %v791 = vld [vmem:[#allocation5 + $0x88] sm:$0xff]
        %v792 = vld [vmem:[#allocation5 + $0x90] sm:$0xff]
        %v793 = vld [vmem:[#allocation5 + $0x98] sm:$0xff]
        %v794 = vld [vmem:[#allocation5 + $0xa0] sm:$0xff]
        %v795 = vld [vmem:[#allocation5 + $0xa8] sm:$0xff]
        %v796 = vld [vmem:[#allocation5 + $0xb0] sm:$0xff]
        %v797 = vld [vmem:[#allocation5 + $0xb8] sm:$0xff]
        %v798 = vld [vmem:[#allocation5 + $0xc0] sm:$0xff]
        %v799 = vld [vmem:[#allocation5 + $0xc8] sm:$0xff]
        %v800 = vld [vmem:[#allocation5 + $0xd0] sm:$0xff]
        %v801 = vld [vmem:[#allocation5 + $0xd8] sm:$0xff]
        %v802 = vld [vmem:[#allocation5 + $0xe0] sm:$0xff]
        %v803 = vld [vmem:[#allocation5 + $0xe8] sm:$0xff]
        %v804 = vld [vmem:[#allocation5 + $0xf0] sm:$0xff]
        %v805 = vld [vmem:[#allocation5 + $0xf8] sm:$0xff]
        %806 = vmatprep.subr.mxu0 %v775
        %807 = vmatpush1.msra.mxu0 %v774
        %808 = vmatprep.subr.mxu0 %v777
        %809 = vmatpush1.msra.mxu0 %v776
        %810 = vmatprep.subr.mxu0 %v779
        %811 = vmatpush1.msra.mxu0 %v778
        %812 = vmatprep.subr.mxu0 %v781
        %813 = vmatpush1.msra.mxu0 %v780
        %814 = vmatprep.subr.mxu0 %v783
        %815 = vmatpush1.msra.mxu0 %v782
        %816 = vmatprep.subr.mxu0 %v785
        %817 = vmatpush1.msra.mxu0 %v784
        %818 = vmatprep.subr.mxu0 %v787
        %819 = vmatpush1.msra.mxu0 %v786
        %820 = vmatprep.subr.mxu0 %v789
        %821 = vmatpush1.msra.mxu0 %v788
        %822 = vmatprep.subr.mxu0 %v791
        %823 = vmatpush1.msra.mxu0 %v790
        %824 = vmatprep.subr.mxu0 %v793
        %825 = vmatpush1.msra.mxu0 %v792
        %826 = vmatprep.subr.mxu0 %v795
        %827 = vmatpush1.msra.mxu0 %v794
        %828 = vmatprep.subr.mxu0 %v797
        %829 = vmatpush1.msra.mxu0 %v796
        %830 = vmatprep.subr.mxu0 %v799
        %831 = vmatpush1.msra.mxu0 %v798
        %832 = vmatprep.subr.mxu0 %v801
        %833 = vmatpush1.msra.mxu0 %v800
        %834 = vmatprep.subr.mxu0 %v803
        %835 = vmatpush1.msra.mxu0 %v802
        %836 = vmatprep.subr.mxu0 %v805
        %837 = vmatpush1.msra.mxu0 %v804
        %838 = vmatprep.subr.mxu0 0.0
        %839 = vmatpush1.msra.mxu0 0.0
        %840 = vmatprep.subr.mxu0 0.0
        %841 = vmatpush1.msra.mxu0 0.0
        %842 = vmatprep.subr.mxu0 0.0
        %843 = vmatpush1.msra.mxu0 0.0
        %844 = vmatprep.subr.mxu0 0.0
        %845 = vmatpush1.msra.mxu0 0.0
        %846 = vmatprep.subr.mxu0 0.0
        %847 = vmatpush1.msra.mxu0 0.0
        %848 = vmatprep.subr.mxu0 0.0
        %849 = vmatpush1.msra.mxu0 0.0
        %850 = vmatprep.subr.mxu0 0.0
        %851 = vmatpush1.msra.mxu0 0.0
        %852 = vmatprep.subr.mxu0 0.0
        %853 = vmatpush1.msra.mxu0 0.0
        %854 = vmatprep.subr.mxu0 0.0
        %855 = vmatpush1.msra.mxu0 0.0
        %856 = vmatprep.subr.mxu0 0.0
        %857 = vmatpush1.msra.mxu0 0.0
        %858 = vmatprep.subr.mxu0 0.0
        %859 = vmatpush1.msra.mxu0 0.0
        %860 = vmatprep.subr.mxu0 0.0
        %861 = vmatpush1.msra.mxu0 0.0
        %862 = vmatprep.subr.mxu0 0.0
        %863 = vmatpush1.msra.mxu0 0.0
        %864 = vmatprep.subr.mxu0 0.0
        %865 = vmatpush1.msra.mxu0 0.0
        %866 = vmatprep.subr.mxu0 0.0
        %867 = vmatpush1.msra.mxu0 0.0
        %868 = vmatprep.subr.mxu0 0.0
        %869 = vmatpush1.msra.mxu0 0.0
        %870 = vmatprep.mubr.f32.mxu0 0.0
        %871 = vmatmul.mubr.f32.gmra.mrb[0].mxu0 %v773
        %v872 = vpop.f32.mrb[0].mxu0
        %v873 = vadd.f32 0.0, %v872
        %v874 = vpop.f32.mrb[0].mxu0
        %v875 = vadd.f32 0.0, %v874
        %876 = vdwg.mxu0
        %v877 = vmul.f32 %v873, %v873
        %v878 = vmul.f32 %v875, %v875
        %v879 = vadd.f32 %v877, %v878
        %v880 = vrsqrt.pop %v879
        %v881 = vmul.f32 %v879, %v880
        %vm882 = vcmp.eq.f32.partialorder %v879, inf
        %v883 = vsel %vm882, %v879, %v881
        %vm884 = vcmp.eq.f32.partialorder %v879, 0.0
        %v885 = vand.u32 %v879, 2147483648
        %v886 = vsel %vm884, %v885, %v883
        %v888 = vrot.slane %v886, 6
        %vm890 = vcmask 1041408
        %v891 = vsel %vm890, 0.0, %v888
        %v892 = vsel %vm890, %v888, 0.0
        %vm895 = vcmask 1045504
        %v896 = vrot.slane %v891, 2
        %v897 = vrot.slane %v892, 2
        %v898 = vsel %vm895, %v896, %v897
        %vm900 = vcmask 1043456
        %v901 = vrot.slane %v891, 4
        %v902 = vrot.slane %v892, 4
        %v903 = vsel %vm900, %v901, %v902
        %v905 = vld [vmem:[%s3] sm:$0xff]
        %v906 = vld [vmem:[%s3 + $0x8] sm:$0xff]
        %v907 = vld [vmem:[%s3 + $0x10] sm:$0xff]
        %v908 = vld [vmem:[%s3 + $0x18] sm:$0xff]
        %v909 = vld [vmem:[%s3 + $0x20] sm:$0xff]
        %v910 = vld [vmem:[%s3 + $0x28] sm:$0xff]
        %v911 = vld [vmem:[%s3 + $0x30] sm:$0xff]
        %v912 = vld [vmem:[%s3 + $0x38] sm:$0xff]
        %v913 = vld [vmem:[%s3 + $0x40] sm:$0xff]
        %v914 = vld [vmem:[%s3 + $0x48] sm:$0xff]
        %v915 = vld [vmem:[%s3 + $0x50] sm:$0xff]
        %v916 = vld [vmem:[%s3 + $0x58] sm:$0xff]
        %v917 = vld [vmem:[%s3 + $0x60] sm:$0xff]
        %v918 = vld [vmem:[%s3 + $0x68] sm:$0xff]
        %v919 = vld [vmem:[%s3 + $0x70] sm:$0xff]
        %v920 = vld [vmem:[%s3 + $0x78] sm:$0xff]
        %v921 = vld [vmem:[%s3 + $0x80] sm:$0xff]
        %v922 = vld [vmem:[%s3 + $0x88] sm:$0xff]
        %v923 = vld [vmem:[%s3 + $0x90] sm:$0xff]
        %v924 = vld [vmem:[%s3 + $0x98] sm:$0xff]
        %v925 = vld [vmem:[%s3 + $0xa0] sm:$0xff]
        %v926 = vld [vmem:[%s3 + $0xa8] sm:$0xff]
        %v927 = vld [vmem:[%s3 + $0xb0] sm:$0xff]
        %v928 = vld [vmem:[%s3 + $0xb8] sm:$0xff]
        %v929 = vld [vmem:[%s3 + $0xc0] sm:$0xff]
        %v930 = vld [vmem:[%s3 + $0xc8] sm:$0xff]
        %v931 = vld [vmem:[%s3 + $0xd0] sm:$0xff]
        %v932 = vld [vmem:[%s3 + $0xd8] sm:$0xff]
        %v933 = vld [vmem:[%s3 + $0xe0] sm:$0xff]
        %v934 = vld [vmem:[%s3 + $0xe8] sm:$0xff]
        %v935 = vld [vmem:[%s3 + $0xf0] sm:$0xff]
        %v936 = vld [vmem:[%s3 + $0xf8] sm:$0xff]
        %v937 = vld [vmem:[%s3 + $0x100] sm:$0xff]
        %v938 = vld [vmem:[%s3 + $0x108] sm:$0xff]
        %v939 = vld [vmem:[%s3 + $0x110] sm:$0xff]
        %v940 = vld [vmem:[%s3 + $0x118] sm:$0xff]
        %v941 = vld [vmem:[%s3 + $0x120] sm:$0xff]
        %v942 = vld [vmem:[%s3 + $0x128] sm:$0xff]
        %v943 = vld [vmem:[%s3 + $0x130] sm:$0xff]
        %v944 = vld [vmem:[%s3 + $0x138] sm:$0xff]
        %v945 = vld [vmem:[%s3 + $0x140] sm:$0xff]
        %v946 = vld [vmem:[%s3 + $0x148] sm:$0xff]
        %v947 = vld [vmem:[%s3 + $0x150] sm:$0xff]
        %v948 = vld [vmem:[%s3 + $0x158] sm:$0xff]
        %v949 = vld [vmem:[%s3 + $0x160] sm:$0xff]
        %v950 = vld [vmem:[%s3 + $0x168] sm:$0xff]
        %v951 = vld [vmem:[%s3 + $0x170] sm:$0xff]
        %v952 = vld [vmem:[%s3 + $0x178] sm:$0xff]
        %v953 = vld [vmem:[%s4] sm:$0x1]
        %v955 = vlaneseq
        %v956 = vshrl.u32 %v955, 7
        %v957 = vsub.s32 0, %v956
        %v958 = vrot.slane %v953, %v957
        %960 = vmatprep.subr.mxu0 0.0
        %961 = vmatpush1.msra.mxu0 %v905
        %962 = vmatprep.subr.mxu0 0.0
        %963 = vmatpush1.msra.mxu0 %v906
        %964 = vmatprep.subr.mxu0 0.0
        %965 = vmatpush1.msra.mxu0 %v907
        %966 = vmatprep.subr.mxu0 0.0
        %967 = vmatpush1.msra.mxu0 %v908
        %968 = vmatprep.subr.mxu0 0.0
        %969 = vmatpush1.msra.mxu0 %v909
        %970 = vmatprep.subr.mxu0 0.0
        %971 = vmatpush1.msra.mxu0 %v910
        %972 = vmatprep.subr.mxu0 0.0
        %973 = vmatpush1.msra.mxu0 %v911
        %974 = vmatprep.subr.mxu0 0.0
        %975 = vmatpush1.msra.mxu0 %v912
        %976 = vmatprep.subr.mxu0 0.0
        %977 = vmatpush1.msra.mxu0 %v913
        %978 = vmatprep.subr.mxu0 0.0
        %979 = vmatpush1.msra.mxu0 %v914
        %980 = vmatprep.subr.mxu0 0.0
        %981 = vmatpush1.msra.mxu0 %v915
        %982 = vmatprep.subr.mxu0 0.0
        %983 = vmatpush1.msra.mxu0 %v916
        %984 = vmatprep.subr.mxu0 0.0
        %985 = vmatpush1.msra.mxu0 %v917
        %986 = vmatprep.subr.mxu0 0.0
        %987 = vmatpush1.msra.mxu0 %v918
        %988 = vmatprep.subr.mxu0 0.0
        %989 = vmatpush1.msra.mxu0 %v919
        %990 = vmatprep.subr.mxu0 0.0
        %991 = vmatpush1.msra.mxu0 %v920
        %992 = vmatprep.subr.mxu0 0.0
        %993 = vmatpush1.msra.mxu0 %v921
        %994 = vmatprep.subr.mxu0 0.0
        %995 = vmatpush1.msra.mxu0 %v922
        %996 = vmatprep.subr.mxu0 0.0
        %997 = vmatpush1.msra.mxu0 %v923
        %998 = vmatprep.subr.mxu0 0.0
        %999 = vmatpush1.msra.mxu0 %v924
        %1000 = vmatprep.subr.mxu0 0.0
        %1001 = vmatpush1.msra.mxu0 %v925
        %1002 = vmatprep.subr.mxu0 0.0
        %1003 = vmatpush1.msra.mxu0 %v926
        %1004 = vmatprep.subr.mxu0 0.0
        %1005 = vmatpush1.msra.mxu0 %v927
        %1006 = vmatprep.subr.mxu0 0.0
        %1007 = vmatpush1.msra.mxu0 %v928
        %1008 = vmatprep.subr.mxu0 0.0
        %1009 = vmatpush1.msra.mxu0 %v929
        %1010 = vmatprep.subr.mxu0 0.0
        %1011 = vmatpush1.msra.mxu0 %v930
        %1012 = vmatprep.subr.mxu0 0.0
        %1013 = vmatpush1.msra.mxu0 %v931
        %1014 = vmatprep.subr.mxu0 0.0
        %1015 = vmatpush1.msra.mxu0 %v932
        %1016 = vmatprep.subr.mxu0 0.0
        %1017 = vmatpush1.msra.mxu0 %v933
        %1018 = vmatprep.subr.mxu0 0.0
        %1019 = vmatpush1.msra.mxu0 %v934
        %1020 = vmatprep.subr.mxu0 0.0
        %1021 = vmatpush1.msra.mxu0 %v935
        %1022 = vmatprep.subr.mxu0 0.0
        %1023 = vmatpush1.msra.mxu0 %v936
        %1024 = vmatprep.mubr.f32.mxu0 %v898
        %1025 = vmatmul.mubr.f32.gmra.mrb[0].mxu0 %v891
        %v1026 = vpop.f32.mrb[0].mxu0
        %v1027 = vadd.f32 %v958, %v1026
        %v1028 = vpop.f32.mrb[0].mxu0
        %1029 = vdwg.mxu0
        %1030 = vmatprep.subr.mxu0 0.0
        %1031 = vmatpush1.msra.mxu0 %v937
        %1032 = vmatprep.subr.mxu0 0.0
        %1033 = vmatpush1.msra.mxu0 %v938
        %1034 = vmatprep.subr.mxu0 0.0
        %1035 = vmatpush1.msra.mxu0 %v939
        %1036 = vmatprep.subr.mxu0 0.0
        %1037 = vmatpush1.msra.mxu0 %v940
        %1038 = vmatprep.subr.mxu0 0.0
        %1039 = vmatpush1.msra.mxu0 %v941
        %1040 = vmatprep.subr.mxu0 0.0
        %1041 = vmatpush1.msra.mxu0 %v942
        %1042 = vmatprep.subr.mxu0 0.0
        %1043 = vmatpush1.msra.mxu0 %v943
        %1044 = vmatprep.subr.mxu0 0.0
        %1045 = vmatpush1.msra.mxu0 %v944
        %1046 = vmatprep.subr.mxu0 0.0
        %1047 = vmatpush1.msra.mxu0 %v945
        %1048 = vmatprep.subr.mxu0 0.0
        %1049 = vmatpush1.msra.mxu0 %v946
        %1050 = vmatprep.subr.mxu0 0.0
        %1051 = vmatpush1.msra.mxu0 %v947
        %1052 = vmatprep.subr.mxu0 0.0
        %1053 = vmatpush1.msra.mxu0 %v948
        %1054 = vmatprep.subr.mxu0 0.0
        %1055 = vmatpush1.msra.mxu0 %v949
        %1056 = vmatprep.subr.mxu0 0.0
        %1057 = vmatpush1.msra.mxu0 %v950
        %1058 = vmatprep.subr.mxu0 0.0
        %1059 = vmatpush1.msra.mxu0 %v951
        %1060 = vmatprep.subr.mxu0 0.0
        %1061 = vmatpush1.msra.mxu0 %v952
        %1062 = vmatprep.subr.mxu0 0.0
        %1063 = vmatpush1.msra.mxu0 0.0
        %1064 = vmatprep.subr.mxu0 0.0
        %1065 = vmatpush1.msra.mxu0 0.0
        %1066 = vmatprep.subr.mxu0 0.0
        %1067 = vmatpush1.msra.mxu0 0.0
        %1068 = vmatprep.subr.mxu0 0.0
        %1069 = vmatpush1.msra.mxu0 0.0
        %1070 = vmatprep.subr.mxu0 0.0
        %1071 = vmatpush1.msra.mxu0 0.0
        %1072 = vmatprep.subr.mxu0 0.0
        %1073 = vmatpush1.msra.mxu0 0.0
        %1074 = vmatprep.subr.mxu0 0.0
        %1075 = vmatpush1.msra.mxu0 0.0
        %1076 = vmatprep.subr.mxu0 0.0
        %1077 = vmatpush1.msra.mxu0 0.0
        %1078 = vmatprep.subr.mxu0 0.0
        %1079 = vmatpush1.msra.mxu0 0.0
        %1080 = vmatprep.subr.mxu0 0.0
        %1081 = vmatpush1.msra.mxu0 0.0
        %1082 = vmatprep.subr.mxu0 0.0
        %1083 = vmatpush1.msra.mxu0 0.0
        %1084 = vmatprep.subr.mxu0 0.0
        %1085 = vmatpush1.msra.mxu0 0.0
        %1086 = vmatprep.subr.mxu0 0.0
        %1087 = vmatpush1.msra.mxu0 0.0
        %1088 = vmatprep.subr.mxu0 0.0
        %1089 = vmatpush1.msra.mxu0 0.0
        %1090 = vmatprep.subr.mxu0 0.0
        %1091 = vmatpush1.msra.mxu0 0.0
        %1092 = vmatprep.subr.mxu0 0.0
        %1093 = vmatpush1.msra.mxu0 0.0
        %1094 = vmatprep.mubr.f32.mxu0 0.0
        %1095 = vmatmul.mubr.f32.gmra.mrb[0].mxu0 %v903
        %v1096 = vpop.f32.mrb[0].mxu0
        %v1097 = vadd.f32 %v1027, %v1096
        %v1098 = vpop.f32.mrb[0].mxu0
        %1099 = vdwg.mxu0
        %v1100 = vrot.slane %v1097, 4
        %v1101 = vadd.f32 %v1097, %v1100
        %v1102 = vrot.slane %v1101, 2
        %v1103 = vadd.f32 %v1101, %v1102
        %v1104 = vrot.slane %v1103, 1
        %v1105 = vadd.f32 %v1103, %v1104
        %v1106 = vrcp.pop 8.0
        %v1107 = vmul.f32 %v1105, %v1106
        %v1108 = vmul.f32 %v1097, %v1097
        %v1109 = vrot.slane %v1108, 4
        %v1110 = vadd.f32 %v1108, %v1109
        %v1111 = vrot.slane %v1110, 2
        %v1112 = vadd.f32 %v1110, %v1111
        %v1113 = vrot.slane %v1112, 1
        %v1114 = vadd.f32 %v1112, %v1113
        %v1115 = vmul.f32 %v1114, %v1106
        %v1116 = vmul.f32 %v1107, %v1107
        %v1117 = vsub.f32 %v1115, %v1116
        %v1118 = vmax.f32 %v1117, 0.0
        %v1119 = vsub.f32 %v1097, %v1107
        %v1120 = vld [vmem:[%s5] sm:$0x1]
        %v1121 = vadd.f32 %v1118, 1e-05
        %v1122 = vrsqrt.pop %v1121
        %v1123 = vmul.f32 %v1120, %v1122
        %v1125 = vlaneseq
        %v1126 = vshrl.u32 %v1125, 7
        %v1127 = vsub.s32 0, %v1126
        %v1128 = vrot.slane %v1123, %v1127
        %v1130 = vmul.f32 %v1119, %v1128
        %v1131 = vld [vmem:[%s6] sm:$0x1]
        %v1133 = vlaneseq
        %v1134 = vshrl.u32 %v1133, 7
        %v1135 = vsub.s32 0, %v1134
        %v1136 = vrot.slane %v1131, %v1135
        %v1138 = vadd.f32 %v1130, %v1136
        %v1139 = vmax.f32 %v1138, 0.0
        %v1141 = vrot.slane %v1139, 6
        %v1143 = vsel %vm890, 0.0, %v1141
        %v1144 = vsel %vm890, %v1141, 0.0
        %v1146 = vrot.slane %v1143, 2
        %v1148 = vsel %vm890, %v1143, %v1146
        %v1149 = vrot.slane %v1143, 4
        %v1151 = vsel %vm890, %v1146, %v1149
        %v1153 = vrot.slane %v1144, 6
        %v1155 = vsel %vm890, %v1149, %v1153
        %v1156 = vld [vmem:[%s7] sm:$0xff]
        %v1157 = vld [vmem:[%s7 + $0x8] sm:$0xff]
        %v1158 = vld [vmem:[%s7 + $0x10] sm:$0xff]
        %v1159 = vld [vmem:[%s7 + $0x18] sm:$0xff]
        %v1160 = vld [vmem:[%s7 + $0x20] sm:$0xff]
        %v1161 = vld [vmem:[%s7 + $0x28] sm:$0xff]
        %v1162 = vld [vmem:[%s7 + $0x30] sm:$0xff]
        %v1163 = vld [vmem:[%s7 + $0x38] sm:$0xff]
        %v1164 = vld [vmem:[%s7 + $0x40] sm:$0xff]
        %v1165 = vld [vmem:[%s7 + $0x48] sm:$0xff]
        %v1166 = vld [vmem:[%s7 + $0x50] sm:$0xff]
        %v1167 = vld [vmem:[%s7 + $0x58] sm:$0xff]
        %v1168 = vld [vmem:[%s7 + $0x60] sm:$0xff]
        %v1169 = vld [vmem:[%s7 + $0x68] sm:$0xff]
        %v1170 = vld [vmem:[%s7 + $0x70] sm:$0xff]
        %v1171 = vld [vmem:[%s7 + $0x78] sm:$0xff]
        %v1172 = vld [vmem:[%s7 + $0x80] sm:$0xff]
        %v1173 = vld [vmem:[%s7 + $0x88] sm:$0xff]
        %v1174 = vld [vmem:[%s7 + $0x90] sm:$0xff]
        %v1175 = vld [vmem:[%s7 + $0x98] sm:$0xff]
        %v1176 = vld [vmem:[%s7 + $0xa0] sm:$0xff]
        %v1177 = vld [vmem:[%s7 + $0xa8] sm:$0xff]
        %v1178 = vld [vmem:[%s7 + $0xb0] sm:$0xff]
        %v1179 = vld [vmem:[%s7 + $0xb8] sm:$0xff]
        %v1180 = vld [vmem:[%s7 + $0xc0] sm:$0xff]
        %v1181 = vld [vmem:[%s7 + $0xc8] sm:$0xff]
        %v1182 = vld [vmem:[%s7 + $0xd0] sm:$0xff]
        %v1183 = vld [vmem:[%s7 + $0xd8] sm:$0xff]
        %v1184 = vld [vmem:[%s7 + $0xe0] sm:$0xff]
        %v1185 = vld [vmem:[%s7 + $0xe8] sm:$0xff]
        %v1186 = vld [vmem:[%s7 + $0xf0] sm:$0xff]
        %v1187 = vld [vmem:[%s7 + $0xf8] sm:$0xff]
        %v1188 = vld [vmem:[%s7 + $0x100] sm:$0xff]
        %v1189 = vld [vmem:[%s7 + $0x108] sm:$0xff]
        %v1190 = vld [vmem:[%s7 + $0x110] sm:$0xff]
        %v1191 = vld [vmem:[%s7 + $0x118] sm:$0xff]
        %v1192 = vld [vmem:[%s7 + $0x120] sm:$0xff]
        %v1193 = vld [vmem:[%s7 + $0x128] sm:$0xff]
        %v1194 = vld [vmem:[%s7 + $0x130] sm:$0xff]
        %v1195 = vld [vmem:[%s7 + $0x138] sm:$0xff]
        %v1196 = vld [vmem:[%s7 + $0x140] sm:$0xff]
        %v1197 = vld [vmem:[%s7 + $0x148] sm:$0xff]
        %v1198 = vld [vmem:[%s7 + $0x150] sm:$0xff]
        %v1199 = vld [vmem:[%s7 + $0x158] sm:$0xff]
        %v1200 = vld [vmem:[%s7 + $0x160] sm:$0xff]
        %v1201 = vld [vmem:[%s7 + $0x168] sm:$0xff]
        %v1202 = vld [vmem:[%s7 + $0x170] sm:$0xff]
        %v1203 = vld [vmem:[%s7 + $0x178] sm:$0xff]
        %v1204 = vld [vmem:[%s8] sm:$0x1]
        %v1206 = vlaneseq
        %v1207 = vshrl.u32 %v1206, 7
        %v1208 = vsub.s32 0, %v1207
        %v1209 = vrot.slane %v1204, %v1208
        %1211 = vmatprep.subr.mxu0 0.0
        %1212 = vmatpush1.msra.mxu0 %v1156
        %1213 = vmatprep.subr.mxu0 0.0
        %1214 = vmatpush1.msra.mxu0 %v1157
        %1215 = vmatprep.subr.mxu0 0.0
        %1216 = vmatpush1.msra.mxu0 %v1158
        %1217 = vmatprep.subr.mxu0 0.0
        %1218 = vmatpush1.msra.mxu0 %v1159
        %1219 = vmatprep.subr.mxu0 0.0
        %1220 = vmatpush1.msra.mxu0 %v1160
        %1221 = vmatprep.subr.mxu0 0.0
        %1222 = vmatpush1.msra.mxu0 %v1161
        %1223 = vmatprep.subr.mxu0 0.0
        %1224 = vmatpush1.msra.mxu0 %v1162
        %1225 = vmatprep.subr.mxu0 0.0
        %1226 = vmatpush1.msra.mxu0 %v1163
        %1227 = vmatprep.subr.mxu0 0.0
        %1228 = vmatpush1.msra.mxu0 %v1164
        %1229 = vmatprep.subr.mxu0 0.0
        %1230 = vmatpush1.msra.mxu0 %v1165
        %1231 = vmatprep.subr.mxu0 0.0
        %1232 = vmatpush1.msra.mxu0 %v1166
        %1233 = vmatprep.subr.mxu0 0.0
        %1234 = vmatpush1.msra.mxu0 %v1167
        %1235 = vmatprep.subr.mxu0 0.0
        %1236 = vmatpush1.msra.mxu0 %v1168
        %1237 = vmatprep.subr.mxu0 0.0
        %1238 = vmatpush1.msra.mxu0 %v1169
        %1239 = vmatprep.subr.mxu0 0.0
        %1240 = vmatpush1.msra.mxu0 %v1170
        %1241 = vmatprep.subr.mxu0 0.0
        %1242 = vmatpush1.msra.mxu0 %v1171
        %1243 = vmatprep.subr.mxu0 0.0
        %1244 = vmatpush1.msra.mxu0 %v1172
        %1245 = vmatprep.subr.mxu0 0.0
        %1246 = vmatpush1.msra.mxu0 %v1173
        %1247 = vmatprep.subr.mxu0 0.0
        %1248 = vmatpush1.msra.mxu0 %v1174
        %1249 = vmatprep.subr.mxu0 0.0
        %1250 = vmatpush1.msra.mxu0 %v1175
        %1251 = vmatprep.subr.mxu0 0.0
        %1252 = vmatpush1.msra.mxu0 %v1176
        %1253 = vmatprep.subr.mxu0 0.0
        %1254 = vmatpush1.msra.mxu0 %v1177
        %1255 = vmatprep.subr.mxu0 0.0
        %1256 = vmatpush1.msra.mxu0 %v1178
        %1257 = vmatprep.subr.mxu0 0.0
        %1258 = vmatpush1.msra.mxu0 %v1179
        %1259 = vmatprep.subr.mxu0 0.0
        %1260 = vmatpush1.msra.mxu0 %v1180
        %1261 = vmatprep.subr.mxu0 0.0
        %1262 = vmatpush1.msra.mxu0 %v1181
        %1263 = vmatprep.subr.mxu0 0.0
        %1264 = vmatpush1.msra.mxu0 %v1182
        %1265 = vmatprep.subr.mxu0 0.0
        %1266 = vmatpush1.msra.mxu0 %v1183
        %1267 = vmatprep.subr.mxu0 0.0
        %1268 = vmatpush1.msra.mxu0 %v1184
        %1269 = vmatprep.subr.mxu0 0.0
        %1270 = vmatpush1.msra.mxu0 %v1185
        %1271 = vmatprep.subr.mxu0 0.0
        %1272 = vmatpush1.msra.mxu0 %v1186
        %1273 = vmatprep.subr.mxu0 0.0
        %1274 = vmatpush1.msra.mxu0 %v1187
        %1275 = vmatprep.mubr.f32.mxu0 %v1151
        %1276 = vmatmul.mubr.f32.gmra.mrb[0].mxu0 %v1148
        %v1277 = vpop.f32.mrb[0].mxu0
        %v1278 = vadd.f32 %v1209, %v1277
        %v1279 = vpop.f32.mrb[0].mxu0
        %1280 = vdwg.mxu0
        %1281 = vmatprep.subr.mxu0 0.0
        %1282 = vmatpush1.msra.mxu0 %v1188
        %1283 = vmatprep.subr.mxu0 0.0
        %1284 = vmatpush1.msra.mxu0 %v1189
        %1285 = vmatprep.subr.mxu0 0.0
        %1286 = vmatpush1.msra.mxu0 %v1190
        %1287 = vmatprep.subr.mxu0 0.0
        %1288 = vmatpush1.msra.mxu0 %v1191
        %1289 = vmatprep.subr.mxu0 0.0
        %1290 = vmatpush1.msra.mxu0 %v1192
        %1291 = vmatprep.subr.mxu0 0.0
        %1292 = vmatpush1.msra.mxu0 %v1193
        %1293 = vmatprep.subr.mxu0 0.0
        %1294 = vmatpush1.msra.mxu0 %v1194
        %1295 = vmatprep.subr.mxu0 0.0
        %1296 = vmatpush1.msra.mxu0 %v1195
        %1297 = vmatprep.subr.mxu0 0.0
        %1298 = vmatpush1.msra.mxu0 %v1196
        %1299 = vmatprep.subr.mxu0 0.0
        %1300 = vmatpush1.msra.mxu0 %v1197
        %1301 = vmatprep.subr.mxu0 0.0
        %1302 = vmatpush1.msra.mxu0 %v1198
        %1303 = vmatprep.subr.mxu0 0.0
        %1304 = vmatpush1.msra.mxu0 %v1199
        %1305 = vmatprep.subr.mxu0 0.0
        %1306 = vmatpush1.msra.mxu0 %v1200
        %1307 = vmatprep.subr.mxu0 0.0
        %1308 = vmatpush1.msra.mxu0 %v1201
        %1309 = vmatprep.subr.mxu0 0.0
        %1310 = vmatpush1.msra.mxu0 %v1202
        %1311 = vmatprep.subr.mxu0 0.0
        %1312 = vmatpush1.msra.mxu0 %v1203
        %1313 = vmatprep.subr.mxu0 0.0
        %1314 = vmatpush1.msra.mxu0 0.0
        %1315 = vmatprep.subr.mxu0 0.0
        %1316 = vmatpush1.msra.mxu0 0.0
        %1317 = vmatprep.subr.mxu0 0.0
        %1318 = vmatpush1.msra.mxu0 0.0
        %1319 = vmatprep.subr.mxu0 0.0
        %1320 = vmatpush1.msra.mxu0 0.0
        %1321 = vmatprep.subr.mxu0 0.0
        %1322 = vmatpush1.msra.mxu0 0.0
        %1323 = vmatprep.subr.mxu0 0.0
        %1324 = vmatpush1.msra.mxu0 0.0
        %1325 = vmatprep.subr.mxu0 0.0
        %1326 = vmatpush1.msra.mxu0 0.0
        %1327 = vmatprep.subr.mxu0 0.0
        %1328 = vmatpush1.msra.mxu0 0.0
        %1329 = vmatprep.subr.mxu0 0.0
        %1330 = vmatpush1.msra.mxu0 0.0
        %1331 = vmatprep.subr.mxu0 0.0
        %1332 = vmatpush1.msra.mxu0 0.0
        %1333 = vmatprep.subr.mxu0 0.0
        %1334 = vmatpush1.msra.mxu0 0.0
        %1335 = vmatprep.subr.mxu0 0.0
        %1336 = vmatpush1.msra.mxu0 0.0
        %1337 = vmatprep.subr.mxu0 0.0
        %1338 = vmatpush1.msra.mxu0 0.0
        %1339 = vmatprep.subr.mxu0 0.0
        %1340 = vmatpush1.msra.mxu0 0.0
        %1341 = vmatprep.subr.mxu0 0.0
        %1342 = vmatpush1.msra.mxu0 0.0
        %1343 = vmatprep.subr.mxu0 0.0
        %1344 = vmatpush1.msra.mxu0 0.0
        %1345 = vmatprep.mubr.f32.mxu0 0.0
        %1346 = vmatmul.mubr.f32.gmra.mrb[0].mxu0 %v1155
        %v1347 = vpop.f32.mrb[0].mxu0
        %v1348 = vadd.f32 %v1278, %v1347
        %v1349 = vpop.f32.mrb[0].mxu0
        %1350 = vdwg.mxu0
        %vm1351 = vcmask 519168
        %v1352 = vsel %vm1351, %v1348, 0.0
        %v1353 = vrot.slane %v1352, 4
        %v1354 = vadd.f32 %v1352, %v1353
        %v1355 = vrot.slane %v1354, 2
        %v1356 = vadd.f32 %v1354, %v1355
        %v1357 = vrot.slane %v1356, 1
        %v1358 = vadd.f32 %v1356, %v1357
        %v1359 = vrcp.pop 4.0
        %v1360 = vmul.f32 %v1358, %v1359
        %v1361 = vmul.f32 %v1348, %v1348
        %v1362 = vsel %vm1351, %v1361, 0.0
        %v1363 = vrot.slane %v1362, 4
        %v1364 = vadd.f32 %v1362, %v1363
        %v1365 = vrot.slane %v1364, 2
        %v1366 = vadd.f32 %v1364, %v1365
        %v1367 = vrot.slane %v1366, 1
        %v1368 = vadd.f32 %v1366, %v1367
        %v1369 = vmul.f32 %v1368, %v1359
        %v1370 = vmul.f32 %v1360, %v1360
        %v1371 = vsub.f32 %v1369, %v1370
        %v1372 = vmax.f32 %v1371, 0.0
        %v1373 = vsub.f32 %v1348, %v1360
        %v1374 = vld [vmem:[%s9] sm:$0x1]
        %v1375 = vadd.f32 %v1372, 1e-05
        %v1376 = vrsqrt.pop %v1375
        %v1377 = vmul.f32 %v1374, %v1376
        %v1379 = vlaneseq
        %v1380 = vshrl.u32 %v1379, 7
        %v1381 = vsub.s32 0, %v1380
        %v1382 = vrot.slane %v1377, %v1381
        %v1384 = vmul.f32 %v1373, %v1382
        %v1385 = vld [vmem:[%s10] sm:$0x1]
        %v1387 = vlaneseq
        %v1388 = vshrl.u32 %v1387, 7
        %v1389 = vsub.s32 0, %v1388
        %v1390 = vrot.slane %v1385, %v1389
        %v1392 = vadd.f32 %v1384, %v1390
        %v1393 = vmax.f32 %v1392, 0.0
        %v1395 = vrot.slane %v1393, 6
        %v1397 = vsel %vm890, 0.0, %v1395
        %v1398 = vsel %vm895, %v1397, 0.0
        %v1400 = vrot.slane %v1398, 2
        %1401 = vrot.lane.b32.xlu0 %v1400, 64
        %v1402 = vpop.permute.xlu0 %1401
        %v1404 = vrot.slane %v1398, 4
        %vm1405 = vcmask 523264
        %v1406 = vsel %vm1405, %v1398, %v1402
        %v1407 = vld [vmem:[%s11] sm:$0xff]
        %v1408 = vld [vmem:[%s11 + $0x8] sm:$0xff]
        %v1409 = vld [vmem:[%s11 + $0x10] sm:$0xff]
        %v1410 = vld [vmem:[%s11 + $0x18] sm:$0xff]
        %v1411 = vld [vmem:[%s11 + $0x20] sm:$0xff]
        %v1412 = vld [vmem:[%s11 + $0x28] sm:$0xff]
        %v1413 = vld [vmem:[%s11 + $0x30] sm:$0xff]
        %v1414 = vld [vmem:[%s11 + $0x38] sm:$0xff]
        %v1415 = vld [vmem:[%s11 + $0x40] sm:$0xff]
        %v1416 = vld [vmem:[%s11 + $0x48] sm:$0xff]
        %v1417 = vld [vmem:[%s11 + $0x50] sm:$0xff]
        %v1418 = vld [vmem:[%s11 + $0x58] sm:$0xff]
        %v1419 = vld [vmem:[%s11 + $0x60] sm:$0xff]
        %v1420 = vld [vmem:[%s11 + $0x68] sm:$0xff]
        %v1421 = vld [vmem:[%s11 + $0x70] sm:$0xff]
        %v1422 = vld [vmem:[%s11 + $0x78] sm:$0xff]
        %v1423 = vld [vmem:[%s11 + $0x80] sm:$0xff]
        %v1424 = vld [vmem:[%s11 + $0x88] sm:$0xff]
        %v1425 = vld [vmem:[%s11 + $0x90] sm:$0xff]
        %v1426 = vld [vmem:[%s11 + $0x98] sm:$0xff]
        %v1427 = vld [vmem:[%s11 + $0xa0] sm:$0xff]
        %v1428 = vld [vmem:[%s11 + $0xa8] sm:$0xff]
        %v1429 = vld [vmem:[%s11 + $0xb0] sm:$0xff]
        %v1430 = vld [vmem:[%s11 + $0xb8] sm:$0xff]
        %v1431 = vld [vmem:[%s12] sm:$0x1]
        %v1433 = vlaneseq
        %v1434 = vshrl.u32 %v1433, 7
        %v1435 = vsub.s32 0, %v1434
        %v1436 = vrot.slane %v1431, %v1435
        %v1438 = vsel %vm1405, %v1404, 0
        %1440 = vmatprep.subr.mxu0 0.0
        %1441 = vmatpush1.msra.mxu0 %v1407
        %1442 = vmatprep.subr.mxu0 0.0
        %1443 = vmatpush1.msra.mxu0 %v1408
        %1444 = vmatprep.subr.mxu0 0.0
        %1445 = vmatpush1.msra.mxu0 %v1409
        %1446 = vmatprep.subr.mxu0 0.0
        %1447 = vmatpush1.msra.mxu0 %v1410
        %1448 = vmatprep.subr.mxu0 0.0
        %1449 = vmatpush1.msra.mxu0 %v1411
        %1450 = vmatprep.subr.mxu0 0.0
        %1451 = vmatpush1.msra.mxu0 %v1412
        %1452 = vmatprep.subr.mxu0 0.0
        %1453 = vmatpush1.msra.mxu0 %v1413
        %1454 = vmatprep.subr.mxu0 0.0
        %1455 = vmatpush1.msra.mxu0 %v1414
        %1456 = vmatprep.subr.mxu0 0.0
        %1457 = vmatpush1.msra.mxu0 %v1415
        %1458 = vmatprep.subr.mxu0 0.0
        %1459 = vmatpush1.msra.mxu0 %v1416
        %1460 = vmatprep.subr.mxu0 0.0
        %1461 = vmatpush1.msra.mxu0 %v1417
        %1462 = vmatprep.subr.mxu0 0.0
        %1463 = vmatpush1.msra.mxu0 %v1418
        %1464 = vmatprep.subr.mxu0 0.0
        %1465 = vmatpush1.msra.mxu0 %v1419
        %1466 = vmatprep.subr.mxu0 0.0
        %1467 = vmatpush1.msra.mxu0 %v1420
        %1468 = vmatprep.subr.mxu0 0.0
        %1469 = vmatpush1.msra.mxu0 %v1421
        %1470 = vmatprep.subr.mxu0 0.0
        %1471 = vmatpush1.msra.mxu0 %v1422
        %1472 = vmatprep.subr.mxu0 0.0
        %1473 = vmatpush1.msra.mxu0 %v1423
        %1474 = vmatprep.subr.mxu0 0.0
        %1475 = vmatpush1.msra.mxu0 %v1424
        %1476 = vmatprep.subr.mxu0 0.0
        %1477 = vmatpush1.msra.mxu0 %v1425
        %1478 = vmatprep.subr.mxu0 0.0
        %1479 = vmatpush1.msra.mxu0 %v1426
        %1480 = vmatprep.subr.mxu0 0.0
        %1481 = vmatpush1.msra.mxu0 %v1427
        %1482 = vmatprep.subr.mxu0 0.0
        %1483 = vmatpush1.msra.mxu0 %v1428
        %1484 = vmatprep.subr.mxu0 0.0
        %1485 = vmatpush1.msra.mxu0 %v1429
        %1486 = vmatprep.subr.mxu0 0.0
        %1487 = vmatpush1.msra.mxu0 %v1430
        %1488 = vmatprep.subr.mxu0 0.0
        %1489 = vmatpush1.msra.mxu0 0.0
        %1490 = vmatprep.subr.mxu0 0.0
        %1491 = vmatpush1.msra.mxu0 0.0
        %1492 = vmatprep.subr.mxu0 0.0
        %1493 = vmatpush1.msra.mxu0 0.0
        %1494 = vmatprep.subr.mxu0 0.0
        %1495 = vmatpush1.msra.mxu0 0.0
        %1496 = vmatprep.subr.mxu0 0.0
        %1497 = vmatpush1.msra.mxu0 0.0
        %1498 = vmatprep.subr.mxu0 0.0
        %1499 = vmatpush1.msra.mxu0 0.0
        %1500 = vmatprep.subr.mxu0 0.0
        %1501 = vmatpush1.msra.mxu0 0.0
        %1502 = vmatprep.subr.mxu0 0.0
        %1503 = vmatpush1.msra.mxu0 0.0
        %1504 = vmatprep.mubr.f32.mxu0 %v1438
        %1505 = vmatmul.mubr.f32.gmra.mrb[0].mxu0 %v1406
        %v1506 = vpop.f32.mrb[0].mxu0
        %v1507 = vadd.f32 %v1436, %v1506
        %v1508 = vpop.f32.mrb[0].mxu0
        %1509 = vdwg.mxu0
        %vm1510 = vcmask 517120
        %v1511 = vsel %vm1510, %v1507, 0.0
        %v1512 = vrot.slane %v1511, 4
        %v1513 = vadd.f32 %v1511, %v1512
        %v1514 = vrot.slane %v1513, 2
        %v1515 = vadd.f32 %v1513, %v1514
        %v1516 = vrot.slane %v1515, 1
        %v1517 = vadd.f32 %v1515, %v1516
        %v1518 = vrcp.pop 2.0
        %v1519 = vmul.f32 %v1517, %v1518
        %v1520 = vmul.f32 %v1507, %v1507
        %v1521 = vsel %vm1510, %v1520, 0.0
        %v1522 = vrot.slane %v1521, 4
        %v1523 = vadd.f32 %v1521, %v1522
        %v1524 = vrot.slane %v1523, 2
        %v1525 = vadd.f32 %v1523, %v1524
        %v1526 = vrot.slane %v1525, 1
        %v1527 = vadd.f32 %v1525, %v1526
        %v1528 = vmul.f32 %v1527, %v1518
        %v1529 = vmul.f32 %v1519, %v1519
        %v1530 = vsub.f32 %v1528, %v1529
        %v1531 = vmax.f32 %v1530, 0.0
        %v1532 = vsub.f32 %v1507, %v1519
        %v1533 = vld [vmem:[%s13] sm:$0x1]
        %v1534 = vadd.f32 %v1531, 1e-05
        %v1535 = vrsqrt.pop %v1534
        %v1536 = vmul.f32 %v1533, %v1535
        %v1538 = vlaneseq
        %v1539 = vshrl.u32 %v1538, 7
        %v1540 = vsub.s32 0, %v1539
        %v1541 = vrot.slane %v1536, %v1540
        %v1543 = vmul.f32 %v1532, %v1541
        %v1544 = vld [vmem:[%s14] sm:$0x1]
        %v1546 = vlaneseq
        %v1547 = vshrl.u32 %v1546, 7
        %v1548 = vsub.s32 0, %v1547
        %v1549 = vrot.slane %v1544, %v1548
        %v1551 = vadd.f32 %v1543, %v1549
        %v1552 = vmax.f32 %v1551, 0.0
        %v1554 = vrot.slane %v1552, 6
        %v1556 = vsel %vm890, 0.0, %v1554
        %v1557 = vsel %vm900, %v1556, 0.0
        %v1559 = vrot.slane %v1557, 2
        %1560 = vrot.lane.b32.xlu0 %v1559, 64
        %v1561 = vpop.permute.xlu0 %1560
        %v1563 = vrot.slane %v1557, 4
        %v1564 = vsel %vm1405, %v1557, %v1561
        %v1565 = vld [vmem:[#allocation8] sm:$0xff]
        %v1566 = vld [vmem:[#allocation8 + $0x8] sm:$0xff]
        %v1567 = vld [vmem:[#allocation8 + $0x10] sm:$0xff]
        %v1568 = vld [vmem:[#allocation8 + $0x18] sm:$0xff]
        %v1569 = vld [vmem:[#allocation8 + $0x20] sm:$0xff]
        %v1570 = vld [vmem:[#allocation8 + $0x28] sm:$0xff]
        %v1571 = vld [vmem:[#allocation8 + $0x30] sm:$0xff]
        %v1572 = vld [vmem:[#allocation8 + $0x38] sm:$0xff]
        %v1573 = vld [vmem:[#allocation8 + $0x40] sm:$0xff]
        %v1574 = vld [vmem:[#allocation8 + $0x48] sm:$0xff]
        %v1575 = vld [vmem:[#allocation8 + $0x50] sm:$0xff]
        %v1576 = vld [vmem:[#allocation8 + $0x58] sm:$0xff]
        %v1577 = vld [vmem:[#allocation8 + $0x60] sm:$0xff]
        %v1578 = vld [vmem:[#allocation8 + $0x68] sm:$0xff]
        %v1579 = vld [vmem:[#allocation8 + $0x70] sm:$0xff]
        %v1580 = vld [vmem:[#allocation8 + $0x78] sm:$0xff]
        %v1581 = vld [vmem:[#allocation8 + $0x80] sm:$0xff]
        %v1582 = vld [vmem:[#allocation8 + $0x88] sm:$0xff]
        %v1583 = vld [vmem:[#allocation8 + $0x90] sm:$0xff]
        %v1584 = vld [vmem:[#allocation8 + $0x98] sm:$0xff]
        %v1585 = vld [vmem:[#allocation8 + $0xa0] sm:$0xff]
        %v1586 = vld [vmem:[#allocation8 + $0xa8] sm:$0xff]
        %v1587 = vld [vmem:[#allocation8 + $0xb0] sm:$0xff]
        %v1588 = vld [vmem:[#allocation8 + $0xb8] sm:$0xff]
        %v1589 = vld [vmem:[%s16] sm:$0x1]
        %v1591 = vlaneseq
        %v1592 = vshrl.u32 %v1591, 7
        %v1593 = vsub.s32 0, %v1592
        %v1594 = vrot.slane %v1589, %v1593
        %v1596 = vsel %vm1405, %v1563, 0
        %1598 = vmatprep.subr.mxu0 0.0
        %1599 = vmatpush1.msra.mxu0 %v1565
        %1600 = vmatprep.subr.mxu0 0.0
        %1601 = vmatpush1.msra.mxu0 %v1566
        %1602 = vmatprep.subr.mxu0 0.0
        %1603 = vmatpush1.msra.mxu0 %v1567
        %1604 = vmatprep.subr.mxu0 0.0
        %1605 = vmatpush1.msra.mxu0 %v1568
        %1606 = vmatprep.subr.mxu0 0.0
        %1607 = vmatpush1.msra.mxu0 %v1569
        %1608 = vmatprep.subr.mxu0 0.0
        %1609 = vmatpush1.msra.mxu0 %v1570
        %1610 = vmatprep.subr.mxu0 0.0
        %1611 = vmatpush1.msra.mxu0 %v1571
        %1612 = vmatprep.subr.mxu0 0.0
        %1613 = vmatpush1.msra.mxu0 %v1572
        %1614 = vmatprep.subr.mxu0 0.0
        %1615 = vmatpush1.msra.mxu0 %v1573
        %1616 = vmatprep.subr.mxu0 0.0
        %1617 = vmatpush1.msra.mxu0 %v1574
        %1618 = vmatprep.subr.mxu0 0.0
        %1619 = vmatpush1.msra.mxu0 %v1575
        %1620 = vmatprep.subr.mxu0 0.0
        %1621 = vmatpush1.msra.mxu0 %v1576
        %1622 = vmatprep.subr.mxu0 0.0
        %1623 = vmatpush1.msra.mxu0 %v1577
        %1624 = vmatprep.subr.mxu0 0.0
        %1625 = vmatpush1.msra.mxu0 %v1578
        %1626 = vmatprep.subr.mxu0 0.0
        %1627 = vmatpush1.msra.mxu0 %v1579
        %1628 = vmatprep.subr.mxu0 0.0
        %1629 = vmatpush1.msra.mxu0 %v1580
        %1630 = vmatprep.subr.mxu0 0.0
        %1631 = vmatpush1.msra.mxu0 %v1581
        %1632 = vmatprep.subr.mxu0 0.0
        %1633 = vmatpush1.msra.mxu0 %v1582
        %1634 = vmatprep.subr.mxu0 0.0
        %1635 = vmatpush1.msra.mxu0 %v1583
        %1636 = vmatprep.subr.mxu0 0.0
        %1637 = vmatpush1.msra.mxu0 %v1584
        %1638 = vmatprep.subr.mxu0 0.0
        %1639 = vmatpush1.msra.mxu0 %v1585
        %1640 = vmatprep.subr.mxu0 0.0
        %1641 = vmatpush1.msra.mxu0 %v1586
        %1642 = vmatprep.subr.mxu0 0.0
        %1643 = vmatpush1.msra.mxu0 %v1587
        %1644 = vmatprep.subr.mxu0 0.0
        %1645 = vmatpush1.msra.mxu0 %v1588
        %1646 = vmatprep.subr.mxu0 0.0
        %1647 = vmatpush1.msra.mxu0 0.0
        %1648 = vmatprep.subr.mxu0 0.0
        %1649 = vmatpush1.msra.mxu0 0.0
        %1650 = vmatprep.subr.mxu0 0.0
        %1651 = vmatpush1.msra.mxu0 0.0
        %1652 = vmatprep.subr.mxu0 0.0
        %1653 = vmatpush1.msra.mxu0 0.0
        %1654 = vmatprep.subr.mxu0 0.0
        %1655 = vmatpush1.msra.mxu0 0.0
        %1656 = vmatprep.subr.mxu0 0.0
        %1657 = vmatpush1.msra.mxu0 0.0
        %1658 = vmatprep.subr.mxu0 0.0
        %1659 = vmatpush1.msra.mxu0 0.0
        %1660 = vmatprep.subr.mxu0 0.0
        %1661 = vmatpush1.msra.mxu0 0.0
        %1662 = vmatprep.mubr.f32.mxu0 %v1596
        %1663 = vmatmul.mubr.f32.gmra.mrb[0].mxu0 %v1564
        %v1664 = vpop.f32.mrb[0].mxu0
        %v1665 = vadd.f32 %v1594, %v1664
        %v1666 = vpop.f32.mrb[0].mxu0
        %1667 = vdwg.mxu0
        %v1668 = vsel %vm890, %v1665, 0.0
        %v1669 = vrot.slane %v1668, 4
        %v1670 = vadd.f32 %v1668, %v1669
        %v1671 = vrot.slane %v1670, 2
        %v1672 = vadd.f32 %v1670, %v1671
        %v1673 = vrot.slane %v1672, 1
        %v1674 = vadd.f32 %v1672, %v1673
        %v1675 = vmul.f32 %v1674, %v1518
        %v1676 = vmul.f32 %v1665, %v1665
        %v1677 = vsel %vm890, %v1676, 0.0
        %v1678 = vrot.slane %v1677, 4
        %v1679 = vadd.f32 %v1677, %v1678
        %v1680 = vrot.slane %v1679, 2
        %v1681 = vadd.f32 %v1679, %v1680
        %v1682 = vrot.slane %v1681, 1
        %v1683 = vadd.f32 %v1681, %v1682
        %v1684 = vmul.f32 %v1683, %v1518
        %v1685 = vmul.f32 %v1675, %v1675
        %v1686 = vsub.f32 %v1684, %v1685
        %v1687 = vmax.f32 %v1686, 0.0
        %v1688 = vsub.f32 %v1665, %v1675
        %v1689 = vld [vmem:[%s17] sm:$0x1]
        %v1690 = vadd.f32 %v1687, 1e-05
        %v1691 = vrsqrt.pop %v1690
        %v1692 = vmul.f32 %v1689, %v1691
        %v1694 = vlaneseq
        %v1695 = vshrl.u32 %v1694, 7
        %v1696 = vsub.s32 0, %v1695
        %v1697 = vrot.slane %v1692, %v1696
        %v1699 = vmul.f32 %v1688, %v1697
        %v1700 = vld [vmem:[%s18] sm:$0x1]
        %v1702 = vlaneseq
        %v1703 = vshrl.u32 %v1702, 7
        %v1704 = vsub.s32 0, %v1703
        %v1705 = vrot.slane %v1700, %v1704
        %v1707 = vadd.f32 %v1699, %v1705
        %v1708 = vmax.f32 %v1707, 0.0
        %v1709 = vld [vmem:[#allocation2] sm:$0x3]
        %v1710 = vld [vmem:[#allocation3] sm:$0x3]
        %v1711 = vld [vmem:[%s19] sm:$0xff]
        %v1712 = vld [vmem:[%s19 + $0x8] sm:$0xff]
        %v1713 = vld [vmem:[%s19 + $0x10] sm:$0xff]
        %v1714 = vld [vmem:[%s19 + $0x18] sm:$0xff]
        %v1715 = vld [vmem:[%s19 + $0x20] sm:$0xff]
        %v1716 = vld [vmem:[%s19 + $0x28] sm:$0xff]
        %v1717 = vld [vmem:[%s19 + $0x30] sm:$0xff]
        %v1718 = vld [vmem:[%s19 + $0x38] sm:$0xff]
        %v1719 = vld [vmem:[%s19 + $0x40] sm:$0xff]
        %v1720 = vld [vmem:[%s19 + $0x48] sm:$0xff]
        %v1721 = vld [vmem:[%s19 + $0x50] sm:$0xff]
        %v1722 = vld [vmem:[%s19 + $0x58] sm:$0xff]
        %v1723 = vld [vmem:[%s19 + $0x60] sm:$0xff]
        %v1724 = vld [vmem:[%s19 + $0x68] sm:$0xff]
        %v1725 = vld [vmem:[%s19 + $0x70] sm:$0xff]
        %v1726 = vld [vmem:[%s19 + $0x78] sm:$0xff]
        %v1727 = vld [vmem:[%s19 + $0x80] sm:$0xff]
        %v1728 = vld [vmem:[%s19 + $0x88] sm:$0xff]
        %v1729 = vld [vmem:[%s19 + $0x90] sm:$0xff]
        %v1730 = vld [vmem:[%s19 + $0x98] sm:$0xff]
        %v1731 = vld [vmem:[%s19 + $0xa0] sm:$0xff]
        %v1732 = vld [vmem:[%s19 + $0xa8] sm:$0xff]
        %v1733 = vld [vmem:[%s19 + $0xb0] sm:$0xff]
        %v1734 = vld [vmem:[%s19 + $0xb8] sm:$0xff]
        %v1735 = vld [vmem:[%s19 + $0xc0] sm:$0xff]
        %v1736 = vld [vmem:[%s19 + $0xc8] sm:$0xff]
        %v1737 = vld [vmem:[%s19 + $0xd0] sm:$0xff]
        %v1738 = vld [vmem:[%s19 + $0xd8] sm:$0xff]
        %v1739 = vld [vmem:[%s19 + $0xe0] sm:$0xff]
        %v1740 = vld [vmem:[%s19 + $0xe8] sm:$0xff]
        %v1741 = vld [vmem:[%s19 + $0xf0] sm:$0xff]
        %v1742 = vld [vmem:[%s19 + $0xf8] sm:$0xff]
        %v1743 = vld [vmem:[%s19 + $0x100] sm:$0xff]
        %v1744 = vld [vmem:[%s19 + $0x108] sm:$0xff]
        %v1745 = vld [vmem:[%s19 + $0x110] sm:$0xff]
        %v1746 = vld [vmem:[%s19 + $0x118] sm:$0xff]
        %v1747 = vld [vmem:[%s19 + $0x120] sm:$0xff]
        %v1748 = vld [vmem:[%s19 + $0x128] sm:$0xff]
        %v1749 = vld [vmem:[%s19 + $0x130] sm:$0xff]
        %v1750 = vld [vmem:[%s19 + $0x138] sm:$0xff]
        %v1751 = vld [vmem:[%s19 + $0x140] sm:$0xff]
        %v1752 = vld [vmem:[%s19 + $0x148] sm:$0xff]
        %v1753 = vld [vmem:[%s19 + $0x150] sm:$0xff]
        %v1754 = vld [vmem:[%s19 + $0x158] sm:$0xff]
        %v1755 = vld [vmem:[%s19 + $0x160] sm:$0xff]
        %v1756 = vld [vmem:[%s19 + $0x168] sm:$0xff]
        %v1757 = vld [vmem:[%s19 + $0x170] sm:$0xff]
        %v1758 = vld [vmem:[%s19 + $0x178] sm:$0xff]
        %v1759 = vld [vmem:[%s19 + $0x180] sm:$0xff]
        %v1760 = vld [vmem:[%s19 + $0x188] sm:$0xff]
        %v1761 = vld [vmem:[%s19 + $0x190] sm:$0xff]
        %v1762 = vld [vmem:[%s19 + $0x198] sm:$0xff]
        %v1763 = vld [vmem:[%s19 + $0x1a0] sm:$0xff]
        %v1764 = vld [vmem:[%s19 + $0x1a8] sm:$0xff]
        %v1765 = vld [vmem:[%s19 + $0x1b0] sm:$0xff]
        %v1766 = vld [vmem:[%s19 + $0x1b8] sm:$0xff]
        %v1767 = vld [vmem:[%s19 + $0x1c0] sm:$0xff]
        %v1768 = vld [vmem:[%s19 + $0x1c8] sm:$0xff]
        %v1769 = vld [vmem:[%s19 + $0x1d0] sm:$0xff]
        %v1770 = vld [vmem:[%s19 + $0x1d8] sm:$0xff]
        %v1771 = vld [vmem:[%s19 + $0x1e0] sm:$0xff]
        %v1772 = vld [vmem:[%s19 + $0x1e8] sm:$0xff]
        %v1773 = vld [vmem:[%s19 + $0x1f0] sm:$0xff]
        %v1774 = vld [vmem:[%s19 + $0x1f8] sm:$0xff]
        %v1775 = vld [vmem:[%s19 + $0x200] sm:$0xff]
        %v1776 = vld [vmem:[%s19 + $0x208] sm:$0xff]
        %v1777 = vld [vmem:[%s19 + $0x210] sm:$0xff]
        %v1778 = vld [vmem:[%s19 + $0x218] sm:$0xff]
        %v1779 = vld [vmem:[%s19 + $0x220] sm:$0xff]
        %v1780 = vld [vmem:[%s19 + $0x228] sm:$0xff]
        %v1781 = vld [vmem:[%s19 + $0x230] sm:$0xff]
        %v1782 = vld [vmem:[%s19 + $0x238] sm:$0xff]
        %v1783 = vld [vmem:[%s19 + $0x240] sm:$0xff]
        %v1784 = vld [vmem:[%s19 + $0x248] sm:$0xff]
        %v1785 = vld [vmem:[%s19 + $0x250] sm:$0xff]
        %v1786 = vld [vmem:[%s19 + $0x258] sm:$0xff]
        %v1787 = vld [vmem:[%s19 + $0x260] sm:$0xff]
        %v1788 = vld [vmem:[%s19 + $0x268] sm:$0xff]
        %v1789 = vld [vmem:[%s19 + $0x270] sm:$0xff]
        %v1790 = vld [vmem:[%s19 + $0x278] sm:$0xff]
        %v1791 = vld [vmem:[%s19 + $0x280] sm:$0xff]
        %v1792 = vld [vmem:[%s19 + $0x288] sm:$0xff]
        %v1793 = vld [vmem:[%s19 + $0x290] sm:$0xff]
        %v1794 = vld [vmem:[%s19 + $0x298] sm:$0xff]
        %v1795 = vld [vmem:[%s19 + $0x2a0] sm:$0xff]
        %v1796 = vld [vmem:[%s19 + $0x2a8] sm:$0xff]
        %v1797 = vld [vmem:[%s19 + $0x2b0] sm:$0xff]
        %v1798 = vld [vmem:[%s19 + $0x2b8] sm:$0xff]
        %v1799 = vld [vmem:[%s19 + $0x2c0] sm:$0xff]
        %v1800 = vld [vmem:[%s19 + $0x2c8] sm:$0xff]
        %v1801 = vld [vmem:[%s19 + $0x2d0] sm:$0xff]
        %v1802 = vld [vmem:[%s19 + $0x2d8] sm:$0xff]
        %v1803 = vld [vmem:[%s19 + $0x2e0] sm:$0xff]
        %v1804 = vld [vmem:[%s19 + $0x2e8] sm:$0xff]
        %v1805 = vld [vmem:[%s19 + $0x2f0] sm:$0xff]
        %v1806 = vld [vmem:[%s19 + $0x2f8] sm:$0xff]
        %v1807 = vld [vmem:[%s19 + $0x300] sm:$0xff]
        %v1808 = vld [vmem:[%s19 + $0x308] sm:$0xff]
        %v1809 = vld [vmem:[%s19 + $0x310] sm:$0xff]
        %v1810 = vld [vmem:[%s19 + $0x318] sm:$0xff]
        %v1811 = vld [vmem:[%s19 + $0x320] sm:$0xff]
        %v1812 = vld [vmem:[%s19 + $0x328] sm:$0xff]
        %v1813 = vld [vmem:[%s19 + $0x330] sm:$0xff]
        %v1814 = vld [vmem:[%s19 + $0x338] sm:$0xff]
        %v1815 = vld [vmem:[%s19 + $0x340] sm:$0xff]
        %v1816 = vld [vmem:[%s19 + $0x348] sm:$0xff]
        %v1817 = vld [vmem:[%s19 + $0x350] sm:$0xff]
        %v1818 = vld [vmem:[%s19 + $0x358] sm:$0xff]
        %v1819 = vld [vmem:[%s19 + $0x360] sm:$0xff]
        %v1820 = vld [vmem:[%s19 + $0x368] sm:$0xff]
        %v1821 = vld [vmem:[%s19 + $0x370] sm:$0xff]
        %v1822 = vld [vmem:[%s19 + $0x378] sm:$0xff]
        %v1823 = vld [vmem:[%s19 + $0x380] sm:$0xff]
        %v1824 = vld [vmem:[%s19 + $0x388] sm:$0xff]
        %v1825 = vld [vmem:[%s19 + $0x390] sm:$0xff]
        %v1826 = vld [vmem:[%s19 + $0x398] sm:$0xff]
        %v1827 = vld [vmem:[%s19 + $0x3a0] sm:$0xff]
        %v1828 = vld [vmem:[%s19 + $0x3a8] sm:$0xff]
        %v1829 = vld [vmem:[%s19 + $0x3b0] sm:$0xff]
        %v1830 = vld [vmem:[%s19 + $0x3b8] sm:$0xff]
        %v1831 = vld [vmem:[%s19 + $0x3c0] sm:$0xff]
        %v1832 = vld [vmem:[%s19 + $0x3c8] sm:$0xff]
        %v1833 = vld [vmem:[%s19 + $0x3d0] sm:$0xff]
        %v1834 = vld [vmem:[%s19 + $0x3d8] sm:$0xff]
        %v1835 = vld [vmem:[%s19 + $0x3e0] sm:$0xff]
        %v1836 = vld [vmem:[%s19 + $0x3e8] sm:$0xff]
        %v1837 = vld [vmem:[%s19 + $0x3f0] sm:$0xff]
        %v1838 = vld [vmem:[%s19 + $0x3f8] sm:$0xff]
        %v1839 = vld [vmem:[%s20] sm:$0xf]
        %v1841 = vlaneseq
        %v1842 = vshrl.u32 %v1841, 7
        %v1843 = vsub.s32 0, %v1842
        %v1844 = vrot.slane %v1839, %v1843
        %v1845 = vlaneseq
        %v1846 = vshrl.u32 %v1845, 7
        %v1847 = vsub.s32 1, %v1846
        %v1848 = vrot.slane %v1839, %v1847
        %v1849 = vlaneseq
        %v1850 = vshrl.u32 %v1849, 7
        %v1851 = vsub.s32 2, %v1850
        %v1852 = vrot.slane %v1839, %v1851
        %v1853 = vlaneseq
        %v1854 = vshrl.u32 %v1853, 7
        %v1855 = vsub.s32 3, %v1854
        %v1856 = vrot.slane %v1839, %v1855
        %1861 = vmatprep.subr.mxu0 %v1712
        %1862 = vmatpush1.msra.mxu0 %v1711
        %1863 = vmatprep.subr.mxu0 %v1716
        %1864 = vmatpush1.msra.mxu0 %v1715
        %1865 = vmatprep.subr.mxu0 %v1720
        %1866 = vmatpush1.msra.mxu0 %v1719
        %1867 = vmatprep.subr.mxu0 %v1724
        %1868 = vmatpush1.msra.mxu0 %v1723
        %1869 = vmatprep.subr.mxu0 %v1728
        %1870 = vmatpush1.msra.mxu0 %v1727
        %1871 = vmatprep.subr.mxu0 %v1732
        %1872 = vmatpush1.msra.mxu0 %v1731
        %1873 = vmatprep.subr.mxu0 %v1736
        %1874 = vmatpush1.msra.mxu0 %v1735
        %1875 = vmatprep.subr.mxu0 %v1740
        %1876 = vmatpush1.msra.mxu0 %v1739
        %1877 = vmatprep.subr.mxu0 %v1744
        %1878 = vmatpush1.msra.mxu0 %v1743
        %1879 = vmatprep.subr.mxu0 %v1748
        %1880 = vmatpush1.msra.mxu0 %v1747
        %1881 = vmatprep.subr.mxu0 %v1752
        %1882 = vmatpush1.msra.mxu0 %v1751
        %1883 = vmatprep.subr.mxu0 %v1756
        %1884 = vmatpush1.msra.mxu0 %v1755
        %1885 = vmatprep.subr.mxu0 %v1760
        %1886 = vmatpush1.msra.mxu0 %v1759
        %1887 = vmatprep.subr.mxu0 %v1764
        %1888 = vmatpush1.msra.mxu0 %v1763
        %1889 = vmatprep.subr.mxu0 %v1768
        %1890 = vmatpush1.msra.mxu0 %v1767
        %1891 = vmatprep.subr.mxu0 %v1772
        %1892 = vmatpush1.msra.mxu0 %v1771
        %1893 = vmatprep.subr.mxu0 %v1776
        %1894 = vmatpush1.msra.mxu0 %v1775
        %1895 = vmatprep.subr.mxu0 %v1780
        %1896 = vmatpush1.msra.mxu0 %v1779
        %1897 = vmatprep.subr.mxu0 %v1784
        %1898 = vmatpush1.msra.mxu0 %v1783
        %1899 = vmatprep.subr.mxu0 %v1788
        %1900 = vmatpush1.msra.mxu0 %v1787
        %1901 = vmatprep.subr.mxu0 %v1792
        %1902 = vmatpush1.msra.mxu0 %v1791
        %1903 = vmatprep.subr.mxu0 %v1796
        %1904 = vmatpush1.msra.mxu0 %v1795
        %1905 = vmatprep.subr.mxu0 %v1800
        %1906 = vmatpush1.msra.mxu0 %v1799
        %1907 = vmatprep.subr.mxu0 %v1804
        %1908 = vmatpush1.msra.mxu0 %v1803
        %1909 = vmatprep.subr.mxu0 %v1808
        %1910 = vmatpush1.msra.mxu0 %v1807
        %1911 = vmatprep.subr.mxu0 %v1812
        %1912 = vmatpush1.msra.mxu0 %v1811
        %1913 = vmatprep.subr.mxu0 %v1816
        %1914 = vmatpush1.msra.mxu0 %v1815
        %1915 = vmatprep.subr.mxu0 %v1820
        %1916 = vmatpush1.msra.mxu0 %v1819
        %1917 = vmatprep.subr.mxu0 %v1824
        %1918 = vmatpush1.msra.mxu0 %v1823
        %1919 = vmatprep.subr.mxu0 %v1828
        %1920 = vmatpush1.msra.mxu0 %v1827
        %1921 = vmatprep.subr.mxu0 %v1832
        %1922 = vmatpush1.msra.mxu0 %v1831
        %1923 = vmatprep.subr.mxu0 %v1836
        %1924 = vmatpush1.msra.mxu0 %v1835
        %1925 = vmatprep.mubr.f32.mxu0 %v1709
        %1926 = vmatmul.mubr.f32.gmra.mrb[0].mxu0 %v1708
        %v1927 = vpop.f32.mrb[0].mxu0
        %v1928 = vadd.f32 %v1844, %v1927
        %v1929 = vpop.f32.mrb[0].mxu0
        %v1930 = vadd.f32 %v1848, %v1929
        %1931 = vdwg.mxu0
        %1932 = vmatprep.subr.mxu0 %v1714
        %1933 = vmatpush1.msra.mxu0 %v1713
        %1934 = vmatprep.subr.mxu0 %v1718
        %1935 = vmatpush1.msra.mxu0 %v1717
        %1936 = vmatprep.subr.mxu0 %v1722
        %1937 = vmatpush1.msra.mxu0 %v1721
        %1938 = vmatprep.subr.mxu0 %v1726
        %1939 = vmatpush1.msra.mxu0 %v1725
        %1940 = vmatprep.subr.mxu0 %v1730
        %1941 = vmatpush1.msra.mxu0 %v1729
        %1942 = vmatprep.subr.mxu0 %v1734
        %1943 = vmatpush1.msra.mxu0 %v1733
        %1944 = vmatprep.subr.mxu0 %v1738
        %1945 = vmatpush1.msra.mxu0 %v1737
        %1946 = vmatprep.subr.mxu0 %v1742
        %1947 = vmatpush1.msra.mxu0 %v1741
        %1948 = vmatprep.subr.mxu0 %v1746
        %1949 = vmatpush1.msra.mxu0 %v1745
        %1950 = vmatprep.subr.mxu0 %v1750
        %1951 = vmatpush1.msra.mxu0 %v1749
        %1952 = vmatprep.subr.mxu0 %v1754
        %1953 = vmatpush1.msra.mxu0 %v1753
        %1954 = vmatprep.subr.mxu0 %v1758
        %1955 = vmatpush1.msra.mxu0 %v1757
        %1956 = vmatprep.subr.mxu0 %v1762
        %1957 = vmatpush1.msra.mxu0 %v1761
        %1958 = vmatprep.subr.mxu0 %v1766
        %1959 = vmatpush1.msra.mxu0 %v1765
        %1960 = vmatprep.subr.mxu0 %v1770
        %1961 = vmatpush1.msra.mxu0 %v1769
        %1962 = vmatprep.subr.mxu0 %v1774
        %1963 = vmatpush1.msra.mxu0 %v1773
        %1964 = vmatprep.subr.mxu0 %v1778
        %1965 = vmatpush1.msra.mxu0 %v1777
        %1966 = vmatprep.subr.mxu0 %v1782
        %1967 = vmatpush1.msra.mxu0 %v1781
        %1968 = vmatprep.subr.mxu0 %v1786
        %1969 = vmatpush1.msra.mxu0 %v1785
        %1970 = vmatprep.subr.mxu0 %v1790
        %1971 = vmatpush1.msra.mxu0 %v1789
        %1972 = vmatprep.subr.mxu0 %v1794
        %1973 = vmatpush1.msra.mxu0 %v1793
        %1974 = vmatprep.subr.mxu0 %v1798
        %1975 = vmatpush1.msra.mxu0 %v1797
        %1976 = vmatprep.subr.mxu0 %v1802
        %1977 = vmatpush1.msra.mxu0 %v1801
        %1978 = vmatprep.subr.mxu0 %v1806
        %1979 = vmatpush1.msra.mxu0 %v1805
        %1980 = vmatprep.subr.mxu0 %v1810
        %1981 = vmatpush1.msra.mxu0 %v1809
        %1982 = vmatprep.subr.mxu0 %v1814
        %1983 = vmatpush1.msra.mxu0 %v1813
        %1984 = vmatprep.subr.mxu0 %v1818
        %1985 = vmatpush1.msra.mxu0 %v1817
        %1986 = vmatprep.subr.mxu0 %v1822
        %1987 = vmatpush1.msra.mxu0 %v1821
        %1988 = vmatprep.subr.mxu0 %v1826
        %1989 = vmatpush1.msra.mxu0 %v1825
        %1990 = vmatprep.subr.mxu0 %v1830
        %1991 = vmatpush1.msra.mxu0 %v1829
        %1992 = vmatprep.subr.mxu0 %v1834
        %1993 = vmatpush1.msra.mxu0 %v1833
        %1994 = vmatprep.subr.mxu0 %v1838
        %1995 = vmatpush1.msra.mxu0 %v1837
        %1996 = vmatprep.mubr.f32.mxu0 %v1709
        %1997 = vmatmul.mubr.f32.gmra.mrb[0].mxu0 %v1708
        %v1998 = vpop.f32.mrb[0].mxu0
        %v1999 = vadd.f32 %v1852, %v1998
        %v2000 = vpop.f32.mrb[0].mxu0
        %v2001 = vadd.f32 %v1856, %v2000
        %2002 = vdwg.mxu0
        %v2003 = vxor.u32 %v1928, 2147483648
        %v2004 = vmul.f32 %v2003, 1.442695
        %v2005 = vpow.pop %v2004
        %v2006 = vadd.f32 %v2005, 1.0
        %v2007 = vrcp.pop %v2006
        %v2008 = vmul.f32 1.0, %v2007
        %v2009 = vxor.u32 %v1930, 2147483648
        %v2010 = vmul.f32 %v2009, 1.442695
        %v2011 = vpow.pop %v2010
        %v2012 = vadd.f32 %v2011, 1.0
        %v2013 = vrcp.pop %v2012
        %v2014 = vmul.f32 1.0, %v2013
        %v2015 = vtanh.pop %v1999
        %v2016 = vxor.u32 %v2001, 2147483648
        %v2017 = vmul.f32 %v2016, 1.442695
        %v2018 = vpow.pop %v2017
        %v2019 = vadd.f32 %v2018, 1.0
        %v2020 = vrcp.pop %v2019
        %v2021 = vmul.f32 1.0, %v2020
        %v2022 = vmul.f32 %v2014, %v1710
        %v2023 = vmul.f32 %v2008, %v2015
        %v2024 = vadd.f32 %v2022, %v2023
        %v2025 = vtanh.pop %v2024
        %v2026 = vmul.f32 %v2021, %v2025
        %2027 = vst [vmem:[#allocation2] sm:$0x3] %v2026
        %2028 = vst [vmem:[#allocation3] sm:$0x3] %v2024
        %v2029 = vmax.f32 %v2026, 0.0
        %v2030 = vld [vmem:[%s21] sm:$0xff]
        %v2031 = vld [vmem:[%s21 + $0x8] sm:$0xff]
        %v2032 = vld [vmem:[%s21 + $0x10] sm:$0xff]
        %v2033 = vld [vmem:[%s21 + $0x18] sm:$0xff]
        %v2034 = vld [vmem:[%s21 + $0x20] sm:$0xff]
        %v2035 = vld [vmem:[%s21 + $0x28] sm:$0xff]
        %v2036 = vld [vmem:[%s21 + $0x30] sm:$0xff]
        %v2037 = vld [vmem:[%s21 + $0x38] sm:$0xff]
        %v2038 = vld [vmem:[%s21 + $0x40] sm:$0xff]
        %v2039 = vld [vmem:[%s21 + $0x48] sm:$0xff]
        %v2040 = vld [vmem:[%s21 + $0x50] sm:$0xff]
        %v2041 = vld [vmem:[%s21 + $0x58] sm:$0xff]
        %v2042 = vld [vmem:[%s21 + $0x60] sm:$0xff]
        %v2043 = vld [vmem:[%s21 + $0x68] sm:$0xff]
        %v2044 = vld [vmem:[%s21 + $0x70] sm:$0xff]
        %v2045 = vld [vmem:[%s21 + $0x78] sm:$0xff]
        %v2046 = vld [vmem:[#allocation4] sm:$0x1]
        %v2048 = vlaneseq
        %v2049 = vshrl.u32 %v2048, 7
        %v2050 = vsub.s32 0, %v2049
        %v2051 = vrot.slane %v2046, %v2050
        %2053 = vmatprep.subr.mxu0 0.0
        %2054 = vmatpush1.msra.mxu0 %v2030
        %2055 = vmatprep.subr.mxu0 0.0
        %2056 = vmatpush1.msra.mxu0 %v2031
        %2057 = vmatprep.subr.mxu0 0.0
        %2058 = vmatpush1.msra.mxu0 %v2032
        %2059 = vmatprep.subr.mxu0 0.0
        %2060 = vmatpush1.msra.mxu0 %v2033
        %2061 = vmatprep.subr.mxu0 0.0
        %2062 = vmatpush1.msra.mxu0 %v2034
        %2063 = vmatprep.subr.mxu0 0.0
        %2064 = vmatpush1.msra.mxu0 %v2035
        %2065 = vmatprep.subr.mxu0 0.0
        %2066 = vmatpush1.msra.mxu0 %v2036
        %2067 = vmatprep.subr.mxu0 0.0
        %2068 = vmatpush1.msra.mxu0 %v2037
        %2069 = vmatprep.subr.mxu0 0.0
        %2070 = vmatpush1.msra.mxu0 %v2038
        %2071 = vmatprep.subr.mxu0 0.0
        %2072 = vmatpush1.msra.mxu0 %v2039
        %2073 = vmatprep.subr.mxu0 0.0
        %2074 = vmatpush1.msra.mxu0 %v2040
        %2075 = vmatprep.subr.mxu0 0.0
        %2076 = vmatpush1.msra.mxu0 %v2041
        %2077 = vmatprep.subr.mxu0 0.0
        %2078 = vmatpush1.msra.mxu0 %v2042
        %2079 = vmatprep.subr.mxu0 0.0
        %2080 = vmatpush1.msra.mxu0 %v2043
        %2081 = vmatprep.subr.mxu0 0.0
        %2082 = vmatpush1.msra.mxu0 %v2044
        %2083 = vmatprep.subr.mxu0 0.0
        %2084 = vmatpush1.msra.mxu0 %v2045
        %2085 = vmatprep.subr.mxu0 0.0
        %2086 = vmatpush1.msra.mxu0 0.0
        %2087 = vmatprep.subr.mxu0 0.0
        %2088 = vmatpush1.msra.mxu0 0.0
        %2089 = vmatprep.subr.mxu0 0.0
        %2090 = vmatpush1.msra.mxu0 0.0
        %2091 = vmatprep.subr.mxu0 0.0
        %2092 = vmatpush1.msra.mxu0 0.0
        %2093 = vmatprep.subr.mxu0 0.0
        %2094 = vmatpush1.msra.mxu0 0.0
        %2095 = vmatprep.subr.mxu0 0.0
        %2096 = vmatpush1.msra.mxu0 0.0
        %2097 = vmatprep.subr.mxu0 0.0
        %2098 = vmatpush1.msra.mxu0 0.0
        %2099 = vmatprep.subr.mxu0 0.0
        %2100 = vmatpush1.msra.mxu0 0.0
        %2101 = vmatprep.subr.mxu0 0.0
        %2102 = vmatpush1.msra.mxu0 0.0
        %2103 = vmatprep.subr.mxu0 0.0
        %2104 = vmatpush1.msra.mxu0 0.0
        %2105 = vmatprep.subr.mxu0 0.0
        %2106 = vmatpush1.msra.mxu0 0.0
        %2107 = vmatprep.subr.mxu0 0.0
        %2108 = vmatpush1.msra.mxu0 0.0
        %2109 = vmatprep.subr.mxu0 0.0
        %2110 = vmatpush1.msra.mxu0 0.0
        %2111 = vmatprep.subr.mxu0 0.0
        %2112 = vmatpush1.msra.mxu0 0.0
        %2113 = vmatprep.subr.mxu0 0.0
        %2114 = vmatpush1.msra.mxu0 0.0
        %2115 = vmatprep.subr.mxu0 0.0
        %2116 = vmatpush1.msra.mxu0 0.0
        %2117 = vmatprep.mubr.f32.mxu0 0.0
        %2118 = vmatmul.mubr.f32.gmra.mrb[0].mxu0 %v2029
        %v2119 = vpop.f32.mrb[0].mxu0
        %v2120 = vadd.f32 %v2051, %v2119
        %v2121 = vpop.f32.mrb[0].mxu0
        %2122 = vdwg.mxu0
        %v2123 = vxor.u32 %v2120, 2147483648
        %v2124 = vmul.f32 %v2123, 1.442695
        %v2125 = vpow.pop %v2124
        %v2126 = vadd.f32 %v2125, 1.0
        %v2127 = vrcp.pop %v2126
        %v2128 = vmul.f32 1.0, %v2127
        %vm2129 = vcmask 1024
        %2130 = vst.msk [vmem:[%s763] sm:$0x3] %vm2129, %v2128
        %p2131 = scmp.eq.s32.totalorder %s41, 7
        // Predicated region
        $region125: #{silero_vad_forward.1} parent=111 // pred_check
          %p2132 = pneg %p2131
        $region126: #{silero_vad_forward.1} parent=111 // pred_check_branch
          %2134 = sbr.rel (%p2132) target = $region128
        $region127: #{silero_vad_forward.1} parent=111 // pred_region
          %2135 = vst [vmem:[#allocation10] sm:$0x3] %v2026
          %s2136 = scalar_lea.vmem [#allocation10], 2
          %2137 = vst [vmem:[%s2136] sm:$0x3] %v2024
        $region128: #{silero_vad_forward.1} parent=111 // pred_fallthru
          _
        %p2138 = scmp.lt.s32.totalorder %s41, 7
        %s2139 = scalar_select %p2138, %s41, 7
        %s2140 = smul.addr %s2139, 2
        %s2141 = scalar_lea.vmem %s23, %s2140
        // Predicated region
        $region129: #{silero_vad_forward.1} parent=111 // pred_check
          %p2142 = pneg %p547
        $region130: #{silero_vad_forward.1} parent=111 // pred_check_branch
          %2144 = sbr.rel (%p2142) target = $region132
        $region131: #{silero_vad_forward.1} parent=111 // pred_region
          _
        $region132: #{silero_vad_forward.1} parent=111 // pred_fallthru
          _
        // Predicated region
        $region133: #{silero_vad_forward.1} parent=111 // pred_check
          %p2145 = pneg %p568
        $region134: #{silero_vad_forward.1} parent=111 // pred_check_branch
          %2147 = sbr.rel (%p2145) target = $region136
        $region135: #{silero_vad_forward.1} parent=111 // pred_region
          %s2149 = ssub.s32 64, 64
          %2150 = vsyncadd [#allocation7], %s2149
          %s2151 = sshll.u32 [#allocation10], 4
          %s2152 = int_to_ptr.vmem [resolvable:$true] %s2151
          %2157 = dma.vmem_to_hbm [thread:$0]  %s2152, 64, %s24, [#allocation7], 32, 32, 2
        $region136: #{silero_vad_forward.1} parent=111 // pred_fallthru
          _
        // Predicated region
        $region137: #{silero_vad_forward.1} parent=111 // pred_check
          %p2158 = pneg %p568
        $region138: #{silero_vad_forward.1} parent=111 // pred_check_branch
          %2160 = sbr.rel (%p2158) target = $region140
        $region139: #{silero_vad_forward.1} parent=111 // pred_region
          %2161 = dma.done [#allocation7], 64
        $region140: #{silero_vad_forward.1} parent=111 // pred_fallthru
          _
      $region112: #{silero_vad_forward.1} parent=5 // pred_fallthru
        _
      %p2162 = scmp.le.s32.totalorder 2, %s36
      // Predicated region
      $region141: #{silero_vad_forward.1} parent=5 // pred_check
        %p2163 = pneg %p2162
      $region142: #{silero_vad_forward.1} parent=5 // pred_check_branch
        %2165 = sbr.rel (%p2163) target = $region144
      $region143: #{silero_vad_forward.1} parent=5 // pred_region
        %s2166 = ssub.s32 %s36, 2
        // Predicated region
        $region145: #{silero_vad_forward.1} parent=143 // pred_check
          %p2167 = pneg %p553
        $region146: #{silero_vad_forward.1} parent=143 // pred_check_branch
          %2169 = sbr.rel (%p2167) target = $region148
        $region147: #{silero_vad_forward.1} parent=143 // pred_region
          %p2170 = scmp.lt.s32.totalorder %s42, 7
          %s2171 = scalar_select %p2170, %s42, 7
          %s2172 = smul.addr %s2171, 2
          %s2173 = scalar_lea.vmem %s23, %s2172
        $region148: #{silero_vad_forward.1} parent=143 // pred_fallthru
          _
      $region144: #{silero_vad_forward.1} parent=5 // pred_fallthru
        _
    $region6: #{silero_vad_forward.1} parent=1 // loop_footer
      %s40 = sadd.s32 1, %s36
    $region7: #{silero_vad_forward.1} parent=1 // loop_footer_branch
      %35 = sbr.rel target = $region3
    $region8: #{silero_vad_forward.1} parent=1 // loop_exit
      _
    %2174 = vsyncpa [#allocation6], 1
    %s2175 = scalar_lea.sflag [#allocation6], 1
    %2176 = vsyncpa %s2175, 1
    %2177 = vsyncpa [#allocation9], 1
    %2178 = vsyncpa [#allocation7], 1
    %s2179 = scalar_lea.sflag [#allocation7], 1
    %2180 = vsyncpa %s2179, 1

</llo_original>
